<compile_context>
chip_gen: v5e
topology: v5e:2x2
jax: 0.10.0
libtpu: 0.0.40
codegen_flags: <defaults>
</compile_context>

<pallas_src>
import functools
import numpy as np
import jax
import jax.numpy as jnp
from jax.experimental import pallas as pl
from jax.experimental.pallas import tpu as pltpu

num_bond_direction = 3
num_bond_type = 6
num_atom_type = 120
num_chirality_tag = 3


def _round_up(x, m):
    return ((x + m - 1) // m) * m


# ---------------------------------------------------------------------------
# Fused multi-layer GIN kernel.  Grid = (num_layer,), h lives in out_ref
# (resident VMEM block) across all layers.
#
#   layer 0:  out <- h0
#   each l:   aggr  = A @ h + S_l
#             hid   = relu(aggr @ W1T_l + b1'_l)      (b1' includes self-loop)
#             h_new = hid @ W2T'_l + shift'_l         (BN affine folded in)
#             out   = relu(h_new)  if l != last  else h_new
# ---------------------------------------------------------------------------
def _fused_gin_kernel(A_ref, h0_ref, S_ref, w1_ref, w2_ref, bias_ref, out_ref):
    l = pl.program_id(0)
    last = pl.num_programs(0) - 1
    D2p = w1_ref.shape[1]                 # padded hidden dim (2*emb_dim)
    Dp = w2_ref.shape[1]                  # padded embedding dim

    @pl.when(l == 0)
    def _init():
        out_ref[...] = h0_ref[...]

    cd = A_ref.dtype                      # matmul compute dtype (bf16 / f32)
    h = out_ref[...]                      # [N_pad, D_pad] f32, resident

    aggr = jnp.dot(A_ref[...], h.astype(cd),
                   preferred_element_type=jnp.float32) + S_ref[...]
    hid = jnp.dot(aggr.astype(cd), w1_ref[...],
                  preferred_element_type=jnp.float32) + bias_ref[0:1, :D2p]
    hid = jnp.maximum(hid, 0.0)
    h_new = jnp.dot(hid.astype(cd), w2_ref[...],
                    preferred_element_type=jnp.float32) + bias_ref[1:2, :Dp]

    @pl.when(l != last)
    def _store_mid():
        out_ref[...] = jnp.maximum(h_new, 0.0)

    @pl.when(l == last)
    def _store_last():
        out_ref[...] = h_new


def _vmem_limit_bytes(resident_bytes, per_layer_bytes):
    """Generation-aware VMEM budget with headroom for Mosaic scratch."""
    try:
        cap = int(pltpu.get_tpu_info().vmem_capacity_bytes)   # 128 MiB v5e/v6e, 64 MiB v7x
    except Exception:
        cap = 64 * 1024 * 1024                                # conservative fallback
    cap = max(16 * 1024 * 1024, cap - 8 * 1024 * 1024)        # leave internal-scratch headroom
    needed = resident_bytes + 2 * per_layer_bytes + 2 * 1024 * 1024
    return int(min(cap, max(needed, 8 * 1024 * 1024)))


def fused_gin_forward(A, h0, S, W1T, W2T, BIAS, *, single_buffer_resident=True):
    L, N_pad, D_pad = S.shape
    D2_pad = W1T.shape[2]
    BP = BIAS.shape[2]

    def nbytes(a):
        return int(a.size) * int(a.dtype.itemsize)

    out_bytes = N_pad * D_pad * 4

    def const_spec(shape):
        idx = lambda l: (0,) * len(shape)
        if single_buffer_resident:
            # Grid-invariant block: fetched once, one VMEM buffer (no double
            # buffering needed since its block index never changes).
            return pl.BlockSpec(shape, idx, pipeline_mode=pl.Buffered(1))
        return pl.BlockSpec(shape, idx)

    def layer_spec(*dims):
        # Leading layer dim squeezed out of the kernel ref (no [0] indexing).
        return pl.BlockSpec((None,) + dims, lambda l: (l,) + (0,) * len(dims))

    resident_bytes = nbytes(A) + nbytes(h0) + 2 * out_bytes
    per_layer_bytes = (nbytes(S) + nbytes(W1T) + nbytes(W2T) + nbytes(BIAS)) // L
    vmem_limit = _vmem_limit_bytes(resident_bytes, per_layer_bytes)

    bytes_accessed = (sum(nbytes(a) for a in (A, h0, S, W1T, W2T, BIAS))
                      + out_bytes)
    flops = 2 * L * N_pad * (N_pad * D_pad + D_pad * D2_pad + D2_pad * D_pad)

    # TODO(synk): for large graphs add a row-tiled / scalar-prefetched sparse
    # aggregation path (and a "parallel" row-tile axis to use v7x's 2nd TC);
    # the dense A is the VMEM/FLOP scaling wall.
    return pl.pallas_call(
        _fused_gin_kernel,
        grid=(L,),
        out_shape=jax.ShapeDtypeStruct((N_pad, D_pad), jnp.float32),
        in_specs=[
            const_spec((N_pad, N_pad)),        # A (adjacency + self loops)
            const_spec((N_pad, D_pad)),        # h0
            layer_spec(N_pad, D_pad),          # S  (edge-embedding scatter)
            layer_spec(D_pad, D2_pad),         # W1^T  (self-loop folded in b1')
            layer_spec(D2_pad, D_pad),         # W2^T * bn_scale
            layer_spec(2, BP),                 # [b1' ; b2*scale + bn_shift]
        ],
        # Output block index is constant across the layer axis -> resident
        # accumulator (layer axis must stay "arbitrary").
        out_specs=pl.BlockSpec((N_pad, D_pad), lambda l: (0, 0)),
        compiler_params=pltpu.CompilerParams(
            dimension_semantics=("arbitrary",),
            vmem_limit_bytes=vmem_limit),
        cost_estimate=pl.CostEstimate(
            flops=int(flops), transcendentals=0,
            bytes_accessed=int(bytes_accessed)),
    )(A, h0, S, W1T, W2T, BIAS)


# ---------------------------------------------------------------------------
# Host-side preparation: padded/lane-dense layout + constant folding.
# NOTE: for inference serving this prep (A scatter, per-layer gathers,
# stacking) should be cached per batch -- at small N it dominates wall time.
# ---------------------------------------------------------------------------
def build_fused_inputs(params, x, edge_index, edge_attr, num_layer,
                       matmul_dtype=jnp.bfloat16):
    eps = 1e-5
    N = x.shape[0]
    D = params["x_emb1"].shape[1]
    D2 = 2 * D
    # 128-aligned N: lane-dense A rows, clean MXU K tiles, bf16-friendly rows.
    N_pad = max(128, _round_up(N, 128))
    D_pad = max(128, _round_up(D, 128))
    D2_pad = max(128, _round_up(D2, 128))
    BP = max(D_pad, D2_pad)

    h0 = params["x_emb1"][x[:, 0]] + params["x_emb2"][x[:, 1]]          # [N, D]
    h0p = jnp.zeros((N_pad, D_pad), jnp.float32).at[:N, :D].set(h0)

    src, dst = edge_index[0], edge_index[1]
    # Dense message-passing operator: A[i, j] = #edges j->i, plus self loops.
    # Small integer edge counts are exact in bf16 while every entry <= 256
    # (always true for molecular multigraphs).
    A = jnp.zeros((N_pad, N_pad), jnp.float32).at[dst, src].add(1.0)
    A = A.at[jnp.arange(N), jnp.arange(N)].add(1.0)
    A = A.astype(matmul_dtype)

    S_list, W1T_list, W2T_list, BIAS_list = [], [], [], []
    for l in range(num_layer):
        lp = params["layers"][l]

        edge_emb = lp["ee1"][edge_attr[:, 0]] + lp["ee2"][edge_attr[:, 1]]  # [E, D]
        S_l = jax.ops.segment_sum(edge_emb, dst, num_segments=N_pad)        # [N_pad, D]
        S_list.append(jnp.zeros((N_pad, D_pad), jnp.float32).at[:, :D].set(S_l))

        self_loop_emb = lp["ee1"][4] + lp["ee2"][0]                         # [D]

        w1t = lp["w1"].T                                                    # [D, 2D]
        b1f = lp["b1"] + self_loop_emb @ w1t                                # fold self loop
        W1T_list.append(
            jnp.zeros((D_pad, D2_pad), jnp.float32).at[:D, :D2].set(w1t)
            .astype(matmul_dtype))

        # eval-mode BatchNormFp32, folded into the second linear layer
        mean = lp["bn_mean"] * lp["bn_mean_scale"]
        var = lp["bn_var"] * lp["bn_var_scale"]
        inv_std = 1.0 / jnp.sqrt(var + eps)
        scale = lp["bn_gamma"] * inv_std                                    # [D]
        shift = lp["bn_beta"] - mean * scale                                # [D]

        w2t = lp["w2"].T * scale[None, :]                                   # [2D, D]
        shf = lp["b2"] * scale + shift                                      # [D]
        W2T_list.append(
            jnp.zeros((D2_pad, D_pad), jnp.float32).at[:D2, :D].set(w2t)
            .astype(matmul_dtype))

        # Pack both tiny bias rows into one block: row 0 = b1', row 1 = shift'.
        bias = (jnp.zeros((2, BP), jnp.float32)
                .at[0, :D2].set(b1f)
                .at[1, :D].set(shf))
        BIAS_list.append(bias)

    S = jnp.stack(S_list)        # [L, N_pad, D_pad]
    W1T = jnp.stack(W1T_list)    # [L, D_pad, D2_pad]
    W2T = jnp.stack(W2T_list)    # [L, D2_pad, D_pad]
    BIAS = jnp.stack(BIAS_list)  # [L, 2, BP]
    return A, h0p, S, W1T, W2T, BIAS, N, D


def gnn_node_representation(params, x, edge_index, edge_attr, num_layer,
                            matmul_dtype=jnp.bfloat16,
                            single_buffer_resident=True):
    A, h0p, S, W1T, W2T, BIAS, N, D = build_fused_inputs(
        params, x, edge_index, edge_attr, num_layer, matmul_dtype)
    out = fused_gin_forward(A, h0p, S, W1T, W2T, BIAS,
                            single_buffer_resident=single_buffer_resident)
    return out[:N, :D]                                  # JK == 'last'


# ---------------------------------------------------------------------------
# Pure-JAX reference (no Pallas) for correctness checking.
# ---------------------------------------------------------------------------
def gnn_node_representation_ref(params, x, edge_index, edge_attr, num_layer):
    N = x.shape[0]
    eps = 1e-5
    h = params["x_emb1"][x[:, 0]] + params["x_emb2"][x[:, 1]]
    D = h.shape[1]
    src, dst = edge_index[0], edge_index[1]
    for l in range(num_layer):
        lp = params["layers"][l]
        edge_emb = lp["ee1"][edge_attr[:, 0]] + lp["ee2"][edge_attr[:, 1]]
        self_loop_emb = lp["ee1"][4] + lp["ee2"][0]
        msg = h[src] + edge_emb
        aggr = jnp.zeros((N, D), jnp.float32).at[dst].add(msg)
        aggr = aggr + h + self_loop_emb[None, :]            # self loops
        hid = jnp.maximum(aggr @ lp["w1"].T + lp["b1"], 0.0)
        h_new = hid @ lp["w2"].T + lp["b2"]
        mean = lp["bn_mean"] * lp["bn_mean_scale"]
        var = lp["bn_var"] * lp["bn_var_scale"]
        h_bn = (h_new - mean) / jnp.sqrt(var + eps) * lp["bn_gamma"] + lp["bn_beta"]
        h = jnp.maximum(h_bn, 0.0) if l != num_layer - 1 else h_bn
    return h


# ---------------------------------------------------------------------------
# Parameter construction (deterministic, synthetic).
# ---------------------------------------------------------------------------
def init_params(key, num_layer, emb_dim):
    def nxt():
        nonlocal key
        key, sub = jax.random.split(key)
        return sub

    def xavier(shape):
        fan_in, fan_out = shape[-1], shape[0]
        bound = float(np.sqrt(6.0 / (fan_in + fan_out)))
        return jax.random.uniform(nxt(), shape, jnp.float32, -bound, bound)

    params = {
        "x_emb1": xavier((num_atom_type, emb_dim)),
        "x_emb2": xavier((num_chirality_tag, emb_dim)),
        "layers": [],
    }
    for _ in range(num_layer):
        lp = {
            "ee1": xavier((num_bond_type, emb_dim)),
            "ee2": xavier((num_bond_direction, emb_dim)),
            "w1": xavier((2 * emb_dim, emb_dim)),          # torch Linear weight
            "b1": 0.01 * jax.random.normal(nxt(), (2 * emb_dim,), jnp.float32),
            "w2": xavier((emb_dim, 2 * emb_dim)),
            "b2": 0.01 * jax.random.normal(nxt(), (emb_dim,), jnp.float32),
            # BatchNormFp32 buffers / affine (default buffer init of the module)
            "bn_gamma": 1.0 + 0.1 * jax.random.normal(nxt(), (emb_dim,), jnp.float32),
            "bn_beta": 0.1 * jax.random.normal(nxt(), (emb_dim,), jnp.float32),
            "bn_mean": jnp.zeros((emb_dim,), jnp.float32),
            "bn_var": jnp.ones((emb_dim,), jnp.float32),
            "bn_mean_scale": jnp.float32(0.0),   # torch.zeros(1, int64)
            "bn_var_scale": jnp.float32(1.0),    # torch.ones(1, int64)
        }
        params["layers"].append(lp)
    return params


# ---------------------------------------------------------------------------
if __name__ == "__main__":
    num_layer = 2
    emb_dim = 32
    num_tasks = 4        # unused by the reference forward (no pooling applied)
    N, E = 16, 24        # nodes, edges

    key = jax.random.PRNGKey(0)
    params = init_params(key, num_layer, emb_dim)

    k1, k2, k3, k4, k5 = jax.random.split(jax.random.PRNGKey(0), 5)
    x = jnp.stack([
        jax.random.randint(k1, (N,), 0, num_atom_type, jnp.int32),
        jax.random.randint(k2, (N,), 0, num_chirality_tag, jnp.int32),
    ], axis=1)                                                     # [N, 2]
    edge_index = jnp.stack([
        jax.random.randint(k3, (E,), 0, N, jnp.int32),             # src
        jax.random.randint(k4, (E,), 0, N, jnp.int32),             # dst
    ], axis=0)                                                     # [2, E]
    edge_attr = jnp.stack([
        jax.random.randint(k5, (E,), 0, num_bond_type, jnp.int32),
        jax.random.randint(jax.random.fold_in(k5, 1), (E,), 0,
                           num_bond_direction, jnp.int32),
    ], axis=1)                                                     # [E, 2]
    batch = jnp.array([0] * 10 + [1] * 6, dtype=jnp.int32)         # [N]

    ref = gnn_node_representation_ref(params, x, edge_index, edge_attr, num_layer)
    ref_np = np.asarray(ref)

    def run_forward(matmul_dtype):
        def make(single_buffer):
            return jax.jit(functools.partial(
                gnn_node_representation, num_layer=num_layer,
                matmul_dtype=matmul_dtype,
                single_buffer_resident=single_buffer))
        try:
            return np.asarray(jax.block_until_ready(
                make(True)(params, x, edge_index, edge_attr)))
        except Exception:
            # Fallback if this JAX build rejects pl.Buffered(1) on the
            # grid-invariant input blocks.
            return np.asarray(jax.block_until_ready(
                make(False)(params, x, edge_index, edge_attr)))

    # Exact PyTorch fp32 semantics path.
    node_rep = run_forward(jnp.float32)
    np.testing.assert_allclose(node_rep, ref_np, rtol=1e-4, atol=1e-4)

    # Default path: bf16 MXU inputs (all generations), f32 accumulate +
    # f32 element-wise.  Adjacency counts are exact in bf16.
    node_rep_bf16 = run_forward(jnp.bfloat16)
    assert np.all(np.isfinite(node_rep_bf16))
    rel_err = (np.linalg.norm(node_rep_bf16 - ref_np)
               / (np.linalg.norm(ref_np) + 1e-6))
    assert rel_err < 5e-2, f"bf16 path relative error too large: {rel_err}"

    # GNN_graphpred.forward: split node representations per molecule.
    # (ragged / dynamic-shape split -> host-side glue; pool and
    #  graph_pred_linear are not applied by the reference forward.)
    batch_np = np.asarray(batch)
    num_mols = int(batch_np[-1]) + 1
    mol_representation = [node_rep[batch_np == i] for i in range(num_mols)]
    assert len(mol_representation) == num_mols
    assert mol_representation[0].shape == (10, emb_dim)
    assert mol_representation[1].shape == (6, emb_dim)

    print("KERNEL_OK")
</pallas_src>

<mosaic_0001>
module attributes {stable_mosaic.version = 11 : i64} {
  func.func @_fused_gin_kernel(%arg0: i32, %arg1: memref<128x128xf32, #tpu.memory_space<vmem>>, %arg2: memref<128x128xf32, #tpu.memory_space<vmem>>, %arg3: memref<1x128x128xf32, #tpu.memory_space<vmem>>, %arg4: memref<1x128x128xf32, #tpu.memory_space<vmem>>, %arg5: memref<1x128x128xf32, #tpu.memory_space<vmem>>, %arg6: memref<1x2x128xf32, #tpu.memory_space<vmem>>, %arg7: memref<128x128xf32, #tpu.memory_space<vmem>>) attributes {dimension_semantics = [#tpu.dimension_semantics<arbitrary>], iteration_bounds = array<i64: 2>, scalar_prefetch = 0 : i64, scratch_operands = 0 : i64, tpu.core_type = #tpu.core_type<tc>, window_params = [{pipeline_mode = #tpu.pipeline_mode<synchronous>, transform_indices = @transform_0, window_bounds = array<i64: 128, 128>}, {pipeline_mode = #tpu.pipeline_mode<synchronous>, transform_indices = @transform_1, window_bounds = array<i64: 128, 128>}, {transform_indices = @transform_2, window_bounds = array<i64: 1, 128, 128>}, {transform_indices = @transform_3, window_bounds = array<i64: 1, 128, 128>}, {transform_indices = @transform_4, window_bounds = array<i64: 1, 128, 128>}, {transform_indices = @transform_5, window_bounds = array<i64: 1, 2, 128>}, {pipeline_mode = #tpu.pipeline_mode<synchronous>, transform_indices = @transform_6, window_bounds = array<i64: 128, 128>}]} {
    %c0_i32 = arith.constant 0 : i32
    %0 = arith.cmpi eq, %arg0, %c0_i32 : i32
    %1 = arith.extui %0 : i1 to i32
    %c0_i32_0 = arith.constant 0 : i32
    %2 = arith.cmpi ne, %1, %c0_i32_0 : i32
    scf.if %2 {
      %c0_24 = arith.constant 0 : index
      %c0_25 = arith.constant 0 : index
      %31 = vector.load %arg2[%c0_24, %c0_25] : memref<128x128xf32, #tpu.memory_space<vmem>>, vector<128x128xf32>
      %c0_26 = arith.constant 0 : index
      %c0_27 = arith.constant 0 : index
      %32 = vector.load %arg7[%c0_26, %c0_27] : memref<128x128xf32, #tpu.memory_space<vmem>>, vector<128x128xf32>
      tpu.vector_store %arg7[%c0_26, %c0_27], %31 {strides = array<i32>} : memref<128x128xf32, #tpu.memory_space<vmem>>, vector<128x128xf32>,
    } else {
    }
    %c0 = arith.constant 0 : index
    %c0_1 = arith.constant 0 : index
    %3 = vector.load %arg7[%c0, %c0_1] : memref<128x128xf32, #tpu.memory_space<vmem>>, vector<128x128xf32>
    %c0_2 = arith.constant 0 : index
    %c0_3 = arith.constant 0 : index
    %4 = vector.load %arg1[%c0_2, %c0_3] : memref<128x128xf32, #tpu.memory_space<vmem>>, vector<128x128xf32>
    %cst = arith.constant dense<0.000000e+00> : vector<128x128xf32>
    %5 = tpu.matmul %4, %3, %cst {dimension_numbers = #tpu.dot_dimension_numbers<[1], [0], [0], [1], [0, 0, 1, 1], [], []>} : vector<128x128xf32>, vector<128x128xf32>, vector<128x128xf32> -> vector<128x128xf32>
    %c0_4 = arith.constant 0 : index
    %c0_5 = arith.constant 0 : index
    %c0_6 = arith.constant 0 : index
    %6 = vector.load %arg3[%c0_4, %c0_5, %c0_6] : memref<1x128x128xf32, #tpu.memory_space<vmem>>, vector<1x128x128xf32>
    %7 = vector.shape_cast %6 : vector<1x128x128xf32> to vector<128x128xf32>
    %8 = arith.addf %5, %7 : vector<128x128xf32>
    %c0_7 = arith.constant 0 : index
    %c0_8 = arith.constant 0 : index
    %c0_9 = arith.constant 0 : index
    %9 = vector.load %arg4[%c0_7, %c0_8, %c0_9] : memref<1x128x128xf32, #tpu.memory_space<vmem>>, vector<1x128x128xf32>
    %10 = vector.shape_cast %9 : vector<1x128x128xf32> to vector<128x128xf32>
    %cst_10 = arith.constant dense<0.000000e+00> : vector<128x128xf32>
    %11 = tpu.matmul %8, %10, %cst_10 {dimension_numbers = #tpu.dot_dimension_numbers<[1], [0], [0], [1], [0, 0, 1, 1], [], []>} : vector<128x128xf32>, vector<128x128xf32>, vector<128x128xf32> -> vector<128x128xf32>
    %c0_11 = arith.constant 0 : index
    %c0_12 = arith.constant 0 : index
    %c0_13 = arith.constant 0 : index
    %12 = vector.load %arg6[%c0_11, %c0_12, %c0_13] : memref<1x2x128xf32, #tpu.memory_space<vmem>>, vector<1x1x128xf32>
    %13 = vector.shape_cast %12 : vector<1x1x128xf32> to vector<1x128xf32>
    %14 = vector.broadcast %13 : vector<1x128xf32> to vector<128x128xf32>
    %15 = arith.addf %11, %14 : vector<128x128xf32>
    %cst_14 = arith.constant 0.000000e+00 : f32
    %16 = vector.broadcast %cst_14 : f32 to vector<128x128xf32>
    %17 = arith.maximumf %15, %16 : vector<128x128xf32>
    %c0_15 = arith.constant 0 : index
    %c0_16 = arith.constant 0 : index
    %c0_17 = arith.constant 0 : index
    %18 = vector.load %arg5[%c0_15, %c0_16, %c0_17] : memref<1x128x128xf32, #tpu.memory_space<vmem>>, vector<1x128x128xf32>
    %19 = vector.shape_cast %18 : vector<1x128x128xf32> to vector<128x128xf32>
    %cst_18 = arith.constant dense<0.000000e+00> : vector<128x128xf32>
    %20 = tpu.matmul %17, %19, %cst_18 {dimension_numbers = #tpu.dot_dimension_numbers<[1], [0], [0], [1], [0, 0, 1, 1], [], []>} : vector<128x128xf32>, vector<128x128xf32>, vector<128x128xf32> -> vector<128x128xf32>
    %c0_19 = arith.constant 0 : index
    %c1 = arith.constant 1 : index
    %c0_20 = arith.constant 0 : index
    %21 = vector.load %arg6[%c0_19, %c1, %c0_20] : memref<1x2x128xf32, #tpu.memory_space<vmem>>, vector<1x1x128xf32>
    %22 = vector.shape_cast %21 : vector<1x1x128xf32> to vector<1x128xf32>
    %23 = vector.broadcast %22 : vector<1x128xf32> to vector<128x128xf32>
    %24 = arith.addf %20, %23 : vector<128x128xf32>
    %c1_i32 = arith.constant 1 : i32
    %25 = arith.cmpi ne, %arg0, %c1_i32 : i32
    %26 = arith.extui %25 : i1 to i32
    %c0_i32_21 = arith.constant 0 : i32
    %27 = arith.cmpi ne, %26, %c0_i32_21 : i32
    scf.if %27 {
      %cst_24 = arith.constant 0.000000e+00 : f32
      %31 = vector.broadcast %cst_24 : f32 to vector<128x128xf32>
      %32 = arith.maximumf %24, %31 : vector<128x128xf32>
      %c0_25 = arith.constant 0 : index
      %c0_26 = arith.constant 0 : index
      %33 = vector.load %arg7[%c0_25, %c0_26] : memref<128x128xf32, #tpu.memory_space<vmem>>, vector<128x128xf32>
      tpu.vector_store %arg7[%c0_25, %c0_26], %32 {strides = array<i32>} : memref<128x128xf32, #tpu.memory_space<vmem>>, vector<128x128xf32>,
    } else {
    }
    %c1_i32_22 = arith.constant 1 : i32
    %28 = arith.cmpi eq, %arg0, %c1_i32_22 : i32
    %29 = arith.extui %28 : i1 to i32
    %c0_i32_23 = arith.constant 0 : i32
    %30 = arith.cmpi ne, %29, %c0_i32_23 : i32
    scf.if %30 {
      %c0_24 = arith.constant 0 : index
      %c0_25 = arith.constant 0 : index
      %31 = vector.load %arg7[%c0_24, %c0_25] : memref<128x128xf32, #tpu.memory_space<vmem>>, vector<128x128xf32>
      tpu.vector_store %arg7[%c0_24, %c0_25], %24 {strides = array<i32>} : memref<128x128xf32, #tpu.memory_space<vmem>>, vector<128x128xf32>,
    } else {
    }
    return
  }
  func.func @transform_0(%arg0: i32) -> (i32, i32) {
    %c0_i32 = arith.constant 0 : i32
    %c0_i32_0 = arith.constant 0 : i32
    %c0_i32_1 = arith.constant 0 : i32
    return %c0_i32, %c0_i32_0 : i32, i32
  }
  func.func @transform_1(%arg0: i32) -> (i32, i32) {
    %c0_i32 = arith.constant 0 : i32
    %c0_i32_0 = arith.constant 0 : i32
    %c0_i32_1 = arith.constant 0 : i32
    return %c0_i32, %c0_i32_0 : i32, i32
  }
  func.func @transform_2(%arg0: i32) -> (i32, i32, i32) {
    %c0_i32 = arith.constant 0 : i32
    %c0_i32_0 = arith.constant 0 : i32
    %c0_i32_1 = arith.constant 0 : i32
    return %arg0, %c0_i32, %c0_i32_0 : i32, i32, i32
  }
  func.func @transform_3(%arg0: i32) -> (i32, i32, i32) {
    %c0_i32 = arith.constant 0 : i32
    %c0_i32_0 = arith.constant 0 : i32
    %c0_i32_1 = arith.constant 0 : i32
    return %arg0, %c0_i32, %c0_i32_0 : i32, i32, i32
  }
  func.func @transform_4(%arg0: i32) -> (i32, i32, i32) {
    %c0_i32 = arith.constant 0 : i32
    %c0_i32_0 = arith.constant 0 : i32
    %c0_i32_1 = arith.constant 0 : i32
    return %arg0, %c0_i32, %c0_i32_0 : i32, i32, i32
  }
  func.func @transform_5(%arg0: i32) -> (i32, i32, i32) {
    %c0_i32 = arith.constant 0 : i32
    %c0_i32_0 = arith.constant 0 : i32
    %c0_i32_1 = arith.constant 0 : i32
    return %arg0, %c0_i32, %c0_i32_0 : i32, i32, i32
  }
  func.func @transform_6(%arg0: i32) -> (i32, i32) {
    %c0_i32 = arith.constant 0 : i32
    %c0_i32_0 = arith.constant 0 : i32
    %c0_i32_1 = arith.constant 0 : i32
    return %c0_i32, %c0_i32_0 : i32, i32
  }
}

module attributes {stable_mosaic.version = 11 : i64} {
  func.func @_fused_gin_kernel(%arg0: i32, %arg1: memref<128x128xf32, #tpu.memory_space<vmem>>, %arg2: memref<128x128xf32, #tpu.memory_space<vmem>>, %arg3: memref<1x128x128xf32, #tpu.memory_space<vmem>>, %arg4: memref<1x128x128xf32, #tpu.memory_space<vmem>>, %arg5: memref<1x128x128xf32, #tpu.memory_space<vmem>>, %arg6: memref<1x2x128xf32, #tpu.memory_space<vmem>>, %arg7: memref<128x128xf32, #tpu.memory_space<vmem>>) attributes {dimension_semantics = [#tpu.dimension_semantics<arbitrary>], iteration_bounds = array<i64: 2>, scalar_prefetch = 0 : i64, scratch_operands = 0 : i64, tpu.core_type = #tpu.core_type<tc>, window_params = [{pipeline_mode = #tpu.pipeline_mode<synchronous>, transform_indices = @transform_0, window_bounds = array<i64: 128, 128>}, {pipeline_mode = #tpu.pipeline_mode<synchronous>, transform_indices = @transform_1, window_bounds = array<i64: 128, 128>}, {transform_indices = @transform_2, window_bounds = array<i64: 1, 128, 128>}, {transform_indices = @transform_3, window_bounds = array<i64: 1, 128, 128>}, {transform_indices = @transform_4, window_bounds = array<i64: 1, 128, 128>}, {transform_indices = @transform_5, window_bounds = array<i64: 1, 2, 128>}, {pipeline_mode = #tpu.pipeline_mode<synchronous>, transform_indices = @transform_6, window_bounds = array<i64: 128, 128>}]} {
    %c0_i32 = arith.constant 0 : i32
    %0 = arith.cmpi eq, %arg0, %c0_i32 : i32
    %1 = arith.extui %0 : i1 to i32
    %c0_i32_0 = arith.constant 0 : i32
    %2 = arith.cmpi ne, %1, %c0_i32_0 : i32
    scf.if %2 {
      %c0_24 = arith.constant 0 : index
      %c0_25 = arith.constant 0 : index
      %31 = vector.load %arg2[%c0_24, %c0_25] : memref<128x128xf32, #tpu.memory_space<vmem>>, vector<128x128xf32>
      %c0_26 = arith.constant 0 : index
      %c0_27 = arith.constant 0 : index
      %32 = vector.load %arg7[%c0_26, %c0_27] : memref<128x128xf32, #tpu.memory_space<vmem>>, vector<128x128xf32>
      tpu.vector_store %arg7[%c0_26, %c0_27], %31 {strides = array<i32>} : memref<128x128xf32, #tpu.memory_space<vmem>>, vector<128x128xf32>,
    } else {
    }
    %c0 = arith.constant 0 : index
    %c0_1 = arith.constant 0 : index
    %3 = vector.load %arg7[%c0, %c0_1] : memref<128x128xf32, #tpu.memory_space<vmem>>, vector<128x128xf32>
    %c0_2 = arith.constant 0 : index
    %c0_3 = arith.constant 0 : index
    %4 = vector.load %arg1[%c0_2, %c0_3] : memref<128x128xf32, #tpu.memory_space<vmem>>, vector<128x128xf32>
    %cst = arith.constant dense<0.000000e+00> : vector<128x128xf32>
    %5 = tpu.matmul %4, %3, %cst {dimension_numbers = #tpu.dot_dimension_numbers<[1], [0], [0], [1], [0, 0, 1, 1], [], []>} : vector<128x128xf32>, vector<128x128xf32>, vector<128x128xf32> -> vector<128x128xf32>
    %c0_4 = arith.constant 0 : index
    %c0_5 = arith.constant 0 : index
    %c0_6 = arith.constant 0 : index
    %6 = vector.load %arg3[%c0_4, %c0_5, %c0_6] : memref<1x128x128xf32, #tpu.memory_space<vmem>>, vector<1x128x128xf32>
    %7 = vector.shape_cast %6 : vector<1x128x128xf32> to vector<128x128xf32>
    %8 = arith.addf %5, %7 : vector<128x128xf32>
    %c0_7 = arith.constant 0 : index
    %c0_8 = arith.constant 0 : index
    %c0_9 = arith.constant 0 : index
    %9 = vector.load %arg4[%c0_7, %c0_8, %c0_9] : memref<1x128x128xf32, #tpu.memory_space<vmem>>, vector<1x128x128xf32>
    %10 = vector.shape_cast %9 : vector<1x128x128xf32> to vector<128x128xf32>
    %cst_10 = arith.constant dense<0.000000e+00> : vector<128x128xf32>
    %11 = tpu.matmul %8, %10, %cst_10 {dimension_numbers = #tpu.dot_dimension_numbers<[1], [0], [0], [1], [0, 0, 1, 1], [], []>} : vector<128x128xf32>, vector<128x128xf32>, vector<128x128xf32> -> vector<128x128xf32>
    %c0_11 = arith.constant 0 : index
    %c0_12 = arith.constant 0 : index
    %c0_13 = arith.constant 0 : index
    %12 = vector.load %arg6[%c0_11, %c0_12, %c0_13] : memref<1x2x128xf32, #tpu.memory_space<vmem>>, vector<1x1x128xf32>
    %13 = vector.shape_cast %12 : vector<1x1x128xf32> to vector<1x128xf32>
    %14 = vector.broadcast %13 : vector<1x128xf32> to vector<128x128xf32>
    %15 = arith.addf %11, %14 : vector<128x128xf32>
    %cst_14 = arith.constant 0.000000e+00 : f32
    %16 = vector.broadcast %cst_14 : f32 to vector<128x128xf32>
    %17 = arith.maximumf %15, %16 : vector<128x128xf32>
    %c0_15 = arith.constant 0 : index
    %c0_16 = arith.constant 0 : index
    %c0_17 = arith.constant 0 : index
    %18 = vector.load %arg5[%c0_15, %c0_16, %c0_17] : memref<1x128x128xf32, #tpu.memory_space<vmem>>, vector<1x128x128xf32>
    %19 = vector.shape_cast %18 : vector<1x128x128xf32> to vector<128x128xf32>
    %cst_18 = arith.constant dense<0.000000e+00> : vector<128x128xf32>
    %20 = tpu.matmul %17, %19, %cst_18 {dimension_numbers = #tpu.dot_dimension_numbers<[1], [0], [0], [1], [0, 0, 1, 1], [], []>} : vector<128x128xf32>, vector<128x128xf32>, vector<128x128xf32> -> vector<128x128xf32>
    %c0_19 = arith.constant 0 : index
    %c1 = arith.constant 1 : index
    %c0_20 = arith.constant 0 : index
    %21 = vector.load %arg6[%c0_19, %c1, %c0_20] : memref<1x2x128xf32, #tpu.memory_space<vmem>>, vector<1x1x128xf32>
    %22 = vector.shape_cast %21 : vector<1x1x128xf32> to vector<1x128xf32>
    %23 = vector.broadcast %22 : vector<1x128xf32> to vector<128x128xf32>
    %24 = arith.addf %20, %23 : vector<128x128xf32>
    %c1_i32 = arith.constant 1 : i32
    %25 = arith.cmpi ne, %arg0, %c1_i32 : i32
    %26 = arith.extui %25 : i1 to i32
    %c0_i32_21 = arith.constant 0 : i32
    %27 = arith.cmpi ne, %26, %c0_i32_21 : i32
    scf.if %27 {
      %cst_24 = arith.constant 0.000000e+00 : f32
      %31 = vector.broadcast %cst_24 : f32 to vector<128x128xf32>
      %32 = arith.maximumf %24, %31 : vector<128x128xf32>
      %c0_25 = arith.constant 0 : index
      %c0_26 = arith.constant 0 : index
      %33 = vector.load %arg7[%c0_25, %c0_26] : memref<128x128xf32, #tpu.memory_space<vmem>>, vector<128x128xf32>
      tpu.vector_store %arg7[%c0_25, %c0_26], %32 {strides = array<i32>} : memref<128x128xf32, #tpu.memory_space<vmem>>, vector<128x128xf32>,
    } else {
    }
    %c1_i32_22 = arith.constant 1 : i32
    %28 = arith.cmpi eq, %arg0, %c1_i32_22 : i32
    %29 = arith.extui %28 : i1 to i32
    %c0_i32_23 = arith.constant 0 : i32
    %30 = arith.cmpi ne, %29, %c0_i32_23 : i32
    scf.if %30 {
      %c0_24 = arith.constant 0 : index
      %c0_25 = arith.constant 0 : index
      %31 = vector.load %arg7[%c0_24, %c0_25] : memref<128x128xf32, #tpu.memory_space<vmem>>, vector<128x128xf32>
      tpu.vector_store %arg7[%c0_24, %c0_25], %24 {strides = array<i32>} : memref<128x128xf32, #tpu.memory_space<vmem>>, vector<128x128xf32>,
    } else {
    }
    return
  }
  func.func @transform_0(%arg0: i32) -> (i32, i32) {
    %c0_i32 = arith.constant 0 : i32
    %c0_i32_0 = arith.constant 0 : i32
    %c0_i32_1 = arith.constant 0 : i32
    return %c0_i32, %c0_i32_0 : i32, i32
  }
  func.func @transform_1(%arg0: i32) -> (i32, i32) {
    %c0_i32 = arith.constant 0 : i32
    %c0_i32_0 = arith.constant 0 : i32
    %c0_i32_1 = arith.constant 0 : i32
    return %c0_i32, %c0_i32_0 : i32, i32
  }
  func.func @transform_2(%arg0: i32) -> (i32, i32, i32) {
    %c0_i32 = arith.constant 0 : i32
    %c0_i32_0 = arith.constant 0 : i32
    %c0_i32_1 = arith.constant 0 : i32
    return %arg0, %c0_i32, %c0_i32_0 : i32, i32, i32
  }
  func.func @transform_3(%arg0: i32) -> (i32, i32, i32) {
    %c0_i32 = arith.constant 0 : i32
    %c0_i32_0 = arith.constant 0 : i32
    %c0_i32_1 = arith.constant 0 : i32
    return %arg0, %c0_i32, %c0_i32_0 : i32, i32, i32
  }
  func.func @transform_4(%arg0: i32) -> (i32, i32, i32) {
    %c0_i32 = arith.constant 0 : i32
    %c0_i32_0 = arith.constant 0 : i32
    %c0_i32_1 = arith.constant 0 : i32
    return %arg0, %c0_i32, %c0_i32_0 : i32, i32, i32
  }
  func.func @transform_5(%arg0: i32) -> (i32, i32, i32) {
    %c0_i32 = arith.constant 0 : i32
    %c0_i32_0 = arith.constant 0 : i32
    %c0_i32_1 = arith.constant 0 : i32
    return %arg0, %c0_i32, %c0_i32_0 : i32, i32, i32
  }
  func.func @transform_6(%arg0: i32) -> (i32, i32) {
    %c0_i32 = arith.constant 0 : i32
    %c0_i32_0 = arith.constant 0 : i32
    %c0_i32_1 = arith.constant 0 : i32
    return %c0_i32, %c0_i32_0 : i32, i32
  }
}

</mosaic_0001>

<llo_original>
// kernel: gnn_node_representation.1
$region0: #{gnn_node_representation.1}
  #allocation0 [shape = 'u32[]', space=smem, size = 0x4, offset = 0x4, fixed_abs, tag = 'smem constant byte address 0x4 - core index']
  #allocation1 [shape = 'u32[72,128]{1,0:T(1,128)}', space=vmem, size = 0x9000, scoped, tag = 'internal scratch']
  %s0 = inlined_call_operand.vmem [shape: f32[128,128], index: 0, kind: input, shape index: {}]
  %s1 = inlined_call_operand.vmem [shape: f32[128,128], index: 1, kind: input, shape index: {}]
  %s2 = inlined_call_operand.vmem [shape: f32[2,128,128], index: 2, kind: input, shape index: {}]
  %s3 = inlined_call_operand.vmem [shape: f32[2,128,128], index: 3, kind: input, shape index: {}]
  %s4 = inlined_call_operand.vmem [shape: f32[2,128,128], index: 4, kind: input, shape index: {}]
  %s5 = inlined_call_operand.vmem [shape: f32[2,2,128], index: 5, kind: input, shape index: {}]
  %s6 = inlined_call_operand.vmem [shape: f32[128,128], index: 6, kind: output, shape index: {}]
  %s7 = sld [smem:[#allocation0]]
  $region69: #{gnn_node_representation.1} parent=0
    _
  %s9 = ssub.s32 1, %s7
  %s10 = scalar_select 0, %s9, %s7
  loop: start=0, step=1, limit=4
  $region2: #{gnn_node_representation.1} parent=0 // loop_pre_header
    _
  $region3: #{gnn_node_representation.1} parent=0 // loop_header
    %s12 = sphi 0, %s16
    %p13 = scmp.ge.s32.totalorder %s12, 4
    %s20 = sphi 0, %s20
    %s22 = sphi 0, %s20
    %s23 = sphi 0, %s22
    %s37 = sphi 0, %s23
    %s41 = sphi 0, %s41
    %s43 = sphi 0, %s41
    %s44 = sphi 0, %s43
    %s58 = sphi 0, %s44
    %s64 = sphi 0, %s66
    %s67 = sphi 0, %s64
    %s68 = sphi 0, %s67
    %s84 = sphi 0, %s68
    %s90 = sphi 0, %s92
    %s93 = sphi 0, %s90
    %s94 = sphi 0, %s93
    %s110 = sphi 0, %s94
    %s116 = sphi 0, %s118
    %s119 = sphi 0, %s116
    %s120 = sphi 0, %s119
    %s136 = sphi 0, %s120
    %s142 = sphi 0, %s144
    %s145 = sphi 0, %s142
    %s146 = sphi 0, %s145
    %s162 = sphi 0, %s146
    %s166 = sphi 0, %s166
    %s168 = sphi 0, %s166
    %s169 = sphi 0, %s168
    %s183 = sphi 0, %s169
  $region4: #{gnn_node_representation.1} parent=0 // loop_header_branch
    %15 = sbr.rel (%p13) target = $region8
  $region5: #{gnn_node_representation.1} parent=0 // loop_body
    %s17 = ssub.s32 %s12, 1
    %s18 = ssub.s32 %s12, 2
    %s19 = sadd.s32 %s12, 1
    %s21 = sadd.s32 %s20, 1
    %p24 = scmp.eq.s32.totalorder %s12, 1
    %p25 = scmp.ne.s32.totalorder %s20, %s22
    %p26 = scmp.eq.s32.totalorder %s12, 0
    %p27 = por %p25, %p26
    %p28 = scmp.ne.s32.totalorder %s20, %s22
    %p29 = scmp.eq.s32.totalorder %s17, 1
    %p30 = por %p28, %p29
    %p31 = scmp.ne.s32.totalorder %s22, %s23
    %p32 = scmp.eq.s32.totalorder %s17, 0
    %p33 = por %p31, %p32
    %p34 = scmp.ne.s32.totalorder %s22, %s23
    %p35 = scmp.eq.s32.totalorder %s18, 1
    %p36 = por %p34, %p35
    %p38 = scmp.ne.s32.totalorder %s23, %s37
    %p39 = scmp.eq.s32.totalorder %s18, 0
    %p40 = por %p38, %p39
    %s42 = sadd.s32 %s41, 1
    %p45 = scmp.eq.s32.totalorder %s12, 1
    %p46 = scmp.ne.s32.totalorder %s41, %s43
    %p47 = scmp.eq.s32.totalorder %s12, 0
    %p48 = por %p46, %p47
    %p49 = scmp.ne.s32.totalorder %s41, %s43
    %p50 = scmp.eq.s32.totalorder %s17, 1
    %p51 = por %p49, %p50
    %p52 = scmp.ne.s32.totalorder %s43, %s44
    %p53 = scmp.eq.s32.totalorder %s17, 0
    %p54 = por %p52, %p53
    %p55 = scmp.ne.s32.totalorder %s43, %s44
    %p56 = scmp.eq.s32.totalorder %s18, 1
    %p57 = por %p55, %p56
    %p59 = scmp.ne.s32.totalorder %s44, %s58
    %p60 = scmp.eq.s32.totalorder %s18, 0
    %p61 = por %p59, %p60
    %s62 = ssub.s32 %s12, %s19
    %p63 = scmp.eq.s32.totalorder %s62, 0
    %s65 = sadd.s32 %s64, 1
    %s66 = scalar_select %p63, %s64, %s65
    %p69 = pneg %p63
    %p70 = scmp.eq.s32.totalorder %s12, 1
    %p71 = por %p69, %p70
    %p72 = scmp.ne.s32.totalorder %s64, %s67
    %p73 = scmp.eq.s32.totalorder %s12, 0
    %p74 = por %p72, %p73
    %p75 = scmp.ne.s32.totalorder %s64, %s67
    %p76 = scmp.eq.s32.totalorder %s17, 1
    %p77 = por %p75, %p76
    %p78 = scmp.ne.s32.totalorder %s67, %s68
    %p79 = scmp.eq.s32.totalorder %s17, 0
    %p80 = por %p78, %p79
    %p81 = scmp.ne.s32.totalorder %s67, %s68
    %p82 = scmp.eq.s32.totalorder %s18, 1
    %p83 = por %p81, %p82
    %p85 = scmp.ne.s32.totalorder %s68, %s84
    %p86 = scmp.eq.s32.totalorder %s18, 0
    %p87 = por %p85, %p86
    %s88 = ssub.s32 %s12, %s19
    %p89 = scmp.eq.s32.totalorder %s88, 0
    %s91 = sadd.s32 %s90, 1
    %s92 = scalar_select %p89, %s90, %s91
    %p95 = pneg %p89
    %p96 = scmp.eq.s32.totalorder %s12, 1
    %p97 = por %p95, %p96
    %p98 = scmp.ne.s32.totalorder %s90, %s93
    %p99 = scmp.eq.s32.totalorder %s12, 0
    %p100 = por %p98, %p99
    %p101 = scmp.ne.s32.totalorder %s90, %s93
    %p102 = scmp.eq.s32.totalorder %s17, 1
    %p103 = por %p101, %p102
    %p104 = scmp.ne.s32.totalorder %s93, %s94
    %p105 = scmp.eq.s32.totalorder %s17, 0
    %p106 = por %p104, %p105
    %p107 = scmp.ne.s32.totalorder %s93, %s94
    %p108 = scmp.eq.s32.totalorder %s18, 1
    %p109 = por %p107, %p108
    %p111 = scmp.ne.s32.totalorder %s94, %s110
    %p112 = scmp.eq.s32.totalorder %s18, 0
    %p113 = por %p111, %p112
    %s114 = ssub.s32 %s12, %s19
    %p115 = scmp.eq.s32.totalorder %s114, 0
    %s117 = sadd.s32 %s116, 1
    %s118 = scalar_select %p115, %s116, %s117
    %p121 = pneg %p115
    %p122 = scmp.eq.s32.totalorder %s12, 1
    %p123 = por %p121, %p122
    %p124 = scmp.ne.s32.totalorder %s116, %s119
    %p125 = scmp.eq.s32.totalorder %s12, 0
    %p126 = por %p124, %p125
    %p127 = scmp.ne.s32.totalorder %s116, %s119
    %p128 = scmp.eq.s32.totalorder %s17, 1
    %p129 = por %p127, %p128
    %p130 = scmp.ne.s32.totalorder %s119, %s120
    %p131 = scmp.eq.s32.totalorder %s17, 0
    %p132 = por %p130, %p131
    %p133 = scmp.ne.s32.totalorder %s119, %s120
    %p134 = scmp.eq.s32.totalorder %s18, 1
    %p135 = por %p133, %p134
    %p137 = scmp.ne.s32.totalorder %s120, %s136
    %p138 = scmp.eq.s32.totalorder %s18, 0
    %p139 = por %p137, %p138
    %s140 = ssub.s32 %s12, %s19
    %p141 = scmp.eq.s32.totalorder %s140, 0
    %s143 = sadd.s32 %s142, 1
    %s144 = scalar_select %p141, %s142, %s143
    %p147 = pneg %p141
    %p148 = scmp.eq.s32.totalorder %s12, 1
    %p149 = por %p147, %p148
    %p150 = scmp.ne.s32.totalorder %s142, %s145
    %p151 = scmp.eq.s32.totalorder %s12, 0
    %p152 = por %p150, %p151
    %p153 = scmp.ne.s32.totalorder %s142, %s145
    %p154 = scmp.eq.s32.totalorder %s17, 1
    %p155 = por %p153, %p154
    %p156 = scmp.ne.s32.totalorder %s145, %s146
    %p157 = scmp.eq.s32.totalorder %s17, 0
    %p158 = por %p156, %p157
    %p159 = scmp.ne.s32.totalorder %s145, %s146
    %p160 = scmp.eq.s32.totalorder %s18, 1
    %p161 = por %p159, %p160
    %p163 = scmp.ne.s32.totalorder %s146, %s162
    %p164 = scmp.eq.s32.totalorder %s18, 0
    %p165 = por %p163, %p164
    %s167 = sadd.s32 %s166, 1
    %p170 = scmp.eq.s32.totalorder %s12, 1
    %p171 = scmp.ne.s32.totalorder %s166, %s168
    %p172 = scmp.eq.s32.totalorder %s12, 0
    %p173 = por %p171, %p172
    %p174 = scmp.ne.s32.totalorder %s166, %s168
    %p175 = scmp.eq.s32.totalorder %s17, 1
    %p176 = por %p174, %p175
    %p177 = scmp.ne.s32.totalorder %s168, %s169
    %p178 = scmp.eq.s32.totalorder %s17, 0
    %p179 = por %p177, %p178
    %p180 = scmp.ne.s32.totalorder %s168, %s169
    %p181 = scmp.eq.s32.totalorder %s18, 1
    %p182 = por %p180, %p181
    %p184 = scmp.ne.s32.totalorder %s169, %s183
    %p185 = scmp.eq.s32.totalorder %s18, 0
    %p186 = por %p184, %p185
    %p187 = scmp.le.s32.totalorder 1, %s12
    %p188 = scmp.lt.s32.totalorder %s12, 3
    %p189 = pnand %p187, %p188
    %p190 = pneg %p189
    // Predicated region
    $region9: #{gnn_node_representation.1} parent=5 // pred_check
      _
    $region10: #{gnn_node_representation.1} parent=5 // pred_check_branch
      %192 = sbr.rel (%p189) target = $region12
    $region11: #{gnn_node_representation.1} parent=5 // pred_region
      %s193 = ssub.s32 %s12, 1
      // Predicated region
      $region13: #{gnn_node_representation.1} parent=11 // pred_check
        %p194 = pneg %p33
      $region14: #{gnn_node_representation.1} parent=11 // pred_check_branch
        %196 = sbr.rel (%p194) target = $region16
      $region15: #{gnn_node_representation.1} parent=11 // pred_region
        _
      $region16: #{gnn_node_representation.1} parent=11 // pred_fallthru
        _
      // Predicated region
      $region17: #{gnn_node_representation.1} parent=11 // pred_check
        %p197 = pneg %p54
      $region18: #{gnn_node_representation.1} parent=11 // pred_check_branch
        %199 = sbr.rel (%p197) target = $region20
      $region19: #{gnn_node_representation.1} parent=11 // pred_region
        _
      $region20: #{gnn_node_representation.1} parent=11 // pred_fallthru
        _
    $region12: #{gnn_node_representation.1} parent=5 // pred_fallthru
      _
    %p200 = scmp.lt.s32.totalorder %s12, 2
    // Predicated region
    $region21: #{gnn_node_representation.1} parent=5 // pred_check
      %p201 = pneg %p200
    $region22: #{gnn_node_representation.1} parent=5 // pred_check_branch
      %203 = sbr.rel (%p201) target = $region24
    $region23: #{gnn_node_representation.1} parent=5 // pred_region
      // Predicated region
      $region25: #{gnn_node_representation.1} parent=23 // pred_check
        %p204 = pneg %p74
      $region26: #{gnn_node_representation.1} parent=23 // pred_check_branch
        %206 = sbr.rel (%p204) target = $region28
      $region27: #{gnn_node_representation.1} parent=23 // pred_region
        %p207 = scmp.lt.s32.totalorder %s12, 1
        %s208 = scalar_select %p207, %s12, 1
        %s209 = smul.addr %s208, 16
        %s210 = smul.addr %s209, 8
        %s211 = scalar_lea.vmem %s2, %s210
      $region28: #{gnn_node_representation.1} parent=23 // pred_fallthru
        _
      // Predicated region
      $region29: #{gnn_node_representation.1} parent=23 // pred_check
        %p212 = pneg %p100
      $region30: #{gnn_node_representation.1} parent=23 // pred_check_branch
        %214 = sbr.rel (%p212) target = $region32
      $region31: #{gnn_node_representation.1} parent=23 // pred_region
        %p215 = scmp.lt.s32.totalorder %s12, 1
        %s216 = scalar_select %p215, %s12, 1
        %s217 = smul.addr %s216, 16
        %s218 = smul.addr %s217, 8
        %s219 = scalar_lea.vmem %s3, %s218
      $region32: #{gnn_node_representation.1} parent=23 // pred_fallthru
        _
      // Predicated region
      $region33: #{gnn_node_representation.1} parent=23 // pred_check
        %p220 = pneg %p126
      $region34: #{gnn_node_representation.1} parent=23 // pred_check_branch
        %222 = sbr.rel (%p220) target = $region36
      $region35: #{gnn_node_representation.1} parent=23 // pred_region
        %p223 = scmp.lt.s32.totalorder %s12, 1
        %s224 = scalar_select %p223, %s12, 1
        %s225 = smul.addr %s224, 16
        %s226 = smul.addr %s225, 8
        %s227 = scalar_lea.vmem %s4, %s226
      $region36: #{gnn_node_representation.1} parent=23 // pred_fallthru
        _
      // Predicated region
      $region37: #{gnn_node_representation.1} parent=23 // pred_check
        %p228 = pneg %p152
      $region38: #{gnn_node_representation.1} parent=23 // pred_check_branch
        %230 = sbr.rel (%p228) target = $region40
      $region39: #{gnn_node_representation.1} parent=23 // pred_region
        %p231 = scmp.lt.s32.totalorder %s12, 1
        %s232 = scalar_select %p231, %s12, 1
        %s233 = smul.addr %s232, 2
        %s234 = scalar_lea.vmem %s5, %s233
      $region40: #{gnn_node_representation.1} parent=23 // pred_fallthru
        _
    $region24: #{gnn_node_representation.1} parent=5 // pred_fallthru
      _
    %p235 = scmp.le.s32.totalorder 1, %s12
    %p236 = scmp.lt.s32.totalorder %s12, 3
    %p237 = pnand %p235, %p236
    %p238 = pneg %p237
    // Predicated region
    $region41: #{gnn_node_representation.1} parent=5 // pred_check
      _
    $region42: #{gnn_node_representation.1} parent=5 // pred_check_branch
      %240 = sbr.rel (%p237) target = $region44
    $region43: #{gnn_node_representation.1} parent=5 // pred_region
      %s241 = ssub.s32 %s12, 1
      %p242 = pneg %p33
      %p243 = pneg %p30
      %p244 = pneg %p54
      %p245 = pneg %p51
      %p246 = scmp.lt.s32.totalorder %s17, 1
      %s247 = scalar_select %p246, %s17, 1
      %s248 = smul.addr %s247, 16
      %s249 = smul.addr %s248, 8
      %s250 = scalar_lea.vmem %s2, %s249
      %p251 = pneg %p80
      %p252 = pneg %p77
      %p253 = scmp.lt.s32.totalorder %s17, 1
      %s254 = scalar_select %p253, %s17, 1
      %s255 = smul.addr %s254, 16
      %s256 = smul.addr %s255, 8
      %s257 = scalar_lea.vmem %s3, %s256
      %p258 = pneg %p106
      %p259 = pneg %p103
      %p260 = scmp.lt.s32.totalorder %s17, 1
      %s261 = scalar_select %p260, %s17, 1
      %s262 = smul.addr %s261, 16
      %s263 = smul.addr %s262, 8
      %s264 = scalar_lea.vmem %s4, %s263
      %p265 = pneg %p132
      %p266 = pneg %p129
      %p267 = scmp.lt.s32.totalorder %s17, 1
      %s268 = scalar_select %p267, %s17, 1
      %s269 = smul.addr %s268, 2
      %s270 = scalar_lea.vmem %s5, %s269
      %p271 = pneg %p158
      %p272 = pneg %p155
      %p273 = pneg %p179
      %p274 = pneg %p176
      %p275 = scmp.lt.s32.totalorder %s17, 1
      %s276 = scalar_select %p275, %s17, 1
      %s277 = smul.addr %s276, 16
      %s278 = smul.addr %s277, 8
      %s279 = scalar_lea.vmem %s2, %s278
      %p280 = scmp.lt.s32.totalorder %s17, 1
      %s281 = scalar_select %p280, %s17, 1
      %s282 = smul.addr %s281, 16
      %s283 = smul.addr %s282, 8
      %s284 = scalar_lea.vmem %s3, %s283
      %p285 = scmp.lt.s32.totalorder %s17, 1
      %s286 = scalar_select %p285, %s17, 1
      %s287 = smul.addr %s286, 16
      %s288 = smul.addr %s287, 8
      %s289 = scalar_lea.vmem %s4, %s288
      %p290 = scmp.lt.s32.totalorder %s17, 1
      %s291 = scalar_select %p290, %s17, 1
      %s292 = smul.addr %s291, 2
      %s293 = scalar_lea.vmem %s5, %s292
      %p294 = scmp.eq.s32.totalorder %s17, 0
      // Predicated region
      $region45: #{gnn_node_representation.1} parent=43 // pred_check
        %p295 = pneg %p294
      $region46: #{gnn_node_representation.1} parent=43 // pred_check_branch
        %297 = sbr.rel (%p295) target = $region48
      $region47: #{gnn_node_representation.1} parent=43 // pred_region
        %v298 = vld [vmem:[%s1] sm:$0xff]
        %v299 = vld [vmem:[%s1 + $0x8] sm:$0xff]
        %v300 = vld [vmem:[%s1 + $0x10] sm:$0xff]
        %v301 = vld [vmem:[%s1 + $0x18] sm:$0xff]
        %v302 = vld [vmem:[%s1 + $0x20] sm:$0xff]
        %v303 = vld [vmem:[%s1 + $0x28] sm:$0xff]
        %v304 = vld [vmem:[%s1 + $0x30] sm:$0xff]
        %v305 = vld [vmem:[%s1 + $0x38] sm:$0xff]
        %v306 = vld [vmem:[%s1 + $0x40] sm:$0xff]
        %v307 = vld [vmem:[%s1 + $0x48] sm:$0xff]
        %v308 = vld [vmem:[%s1 + $0x50] sm:$0xff]
        %v309 = vld [vmem:[%s1 + $0x58] sm:$0xff]
        %v310 = vld [vmem:[%s1 + $0x60] sm:$0xff]
        %v311 = vld [vmem:[%s1 + $0x68] sm:$0xff]
        %v312 = vld [vmem:[%s1 + $0x70] sm:$0xff]
        %v313 = vld [vmem:[%s1 + $0x78] sm:$0xff]
        %314 = vst [vmem:[%s6] sm:$0xff] %v298
        %315 = vst [vmem:[%s6 + $0x8] sm:$0xff] %v299
        %316 = vst [vmem:[%s6 + $0x10] sm:$0xff] %v300
        %317 = vst [vmem:[%s6 + $0x18] sm:$0xff] %v301
        %318 = vst [vmem:[%s6 + $0x20] sm:$0xff] %v302
        %319 = vst [vmem:[%s6 + $0x28] sm:$0xff] %v303
        %320 = vst [vmem:[%s6 + $0x30] sm:$0xff] %v304
        %321 = vst [vmem:[%s6 + $0x38] sm:$0xff] %v305
        %322 = vst [vmem:[%s6 + $0x40] sm:$0xff] %v306
        %323 = vst [vmem:[%s6 + $0x48] sm:$0xff] %v307
        %324 = vst [vmem:[%s6 + $0x50] sm:$0xff] %v308
        %325 = vst [vmem:[%s6 + $0x58] sm:$0xff] %v309
        %326 = vst [vmem:[%s6 + $0x60] sm:$0xff] %v310
        %327 = vst [vmem:[%s6 + $0x68] sm:$0xff] %v311
        %328 = vst [vmem:[%s6 + $0x70] sm:$0xff] %v312
        %329 = vst [vmem:[%s6 + $0x78] sm:$0xff] %v313
      $region48: #{gnn_node_representation.1} parent=43 // pred_fallthru
        _
      %v330 = vld [vmem:[%s6] sm:$0xff]
      %v331 = vld [vmem:[%s6 + $0x8] sm:$0xff]
      %v332 = vld [vmem:[%s6 + $0x10] sm:$0xff]
      %v333 = vld [vmem:[%s6 + $0x18] sm:$0xff]
      %v334 = vld [vmem:[%s6 + $0x20] sm:$0xff]
      %v335 = vld [vmem:[%s6 + $0x28] sm:$0xff]
      %v336 = vld [vmem:[%s6 + $0x30] sm:$0xff]
      %v337 = vld [vmem:[%s6 + $0x38] sm:$0xff]
      %v338 = vld [vmem:[%s6 + $0x40] sm:$0xff]
      %v339 = vld [vmem:[%s6 + $0x48] sm:$0xff]
      %v340 = vld [vmem:[%s6 + $0x50] sm:$0xff]
      %v341 = vld [vmem:[%s6 + $0x58] sm:$0xff]
      %v342 = vld [vmem:[%s6 + $0x60] sm:$0xff]
      %v343 = vld [vmem:[%s6 + $0x68] sm:$0xff]
      %v344 = vld [vmem:[%s6 + $0x70] sm:$0xff]
      %v345 = vld [vmem:[%s6 + $0x78] sm:$0xff]
      %v346 = vld [vmem:[%s0] sm:$0xff]
      %v347 = vld [vmem:[%s0 + $0x8] sm:$0xff]
      %v348 = vld [vmem:[%s0 + $0x10] sm:$0xff]
      %v349 = vld [vmem:[%s0 + $0x18] sm:$0xff]
      %v350 = vld [vmem:[%s0 + $0x20] sm:$0xff]
      %v351 = vld [vmem:[%s0 + $0x28] sm:$0xff]
      %v352 = vld [vmem:[%s0 + $0x30] sm:$0xff]
      %v353 = vld [vmem:[%s0 + $0x38] sm:$0xff]
      %v354 = vld [vmem:[%s0 + $0x40] sm:$0xff]
      %v355 = vld [vmem:[%s0 + $0x48] sm:$0xff]
      %v356 = vld [vmem:[%s0 + $0x50] sm:$0xff]
      %v357 = vld [vmem:[%s0 + $0x58] sm:$0xff]
      %v358 = vld [vmem:[%s0 + $0x60] sm:$0xff]
      %v359 = vld [vmem:[%s0 + $0x68] sm:$0xff]
      %v360 = vld [vmem:[%s0 + $0x70] sm:$0xff]
      %v361 = vld [vmem:[%s0 + $0x78] sm:$0xff]
      %v362 = vld [vmem:[%s279] sm:$0xff]
      %v363 = vld [vmem:[%s279 + $0x8] sm:$0xff]
      %v364 = vld [vmem:[%s279 + $0x10] sm:$0xff]
      %v365 = vld [vmem:[%s279 + $0x18] sm:$0xff]
      %v366 = vld [vmem:[%s279 + $0x20] sm:$0xff]
      %v367 = vld [vmem:[%s279 + $0x28] sm:$0xff]
      %v368 = vld [vmem:[%s279 + $0x30] sm:$0xff]
      %v369 = vld [vmem:[%s279 + $0x38] sm:$0xff]
      %v370 = vld [vmem:[%s279 + $0x40] sm:$0xff]
      %v371 = vld [vmem:[%s279 + $0x48] sm:$0xff]
      %v372 = vld [vmem:[%s279 + $0x50] sm:$0xff]
      %v373 = vld [vmem:[%s279 + $0x58] sm:$0xff]
      %v374 = vld [vmem:[%s279 + $0x60] sm:$0xff]
      %v375 = vld [vmem:[%s279 + $0x68] sm:$0xff]
      %v376 = vld [vmem:[%s279 + $0x70] sm:$0xff]
      %v377 = vld [vmem:[%s279 + $0x78] sm:$0xff]
      %378 = vmatpush.msra.mxu0 %v345
      %379 = vmatpush.msra.mxu0 %v344
      %380 = vmatpush.msra.mxu0 %v343
      %381 = vmatpush.msra.mxu0 %v342
      %382 = vmatpush.msra.mxu0 %v341
      %383 = vmatpush.msra.mxu0 %v340
      %384 = vmatpush.msra.mxu0 %v339
      %385 = vmatpush.msra.mxu0 %v338
      %386 = vmatpush.msra.mxu0 %v337
      %387 = vmatpush.msra.mxu0 %v336
      %388 = vmatpush.msra.mxu0 %v335
      %389 = vmatpush.msra.mxu0 %v334
      %390 = vmatpush.msra.mxu0 %v333
      %391 = vmatpush.msra.mxu0 %v332
      %392 = vmatpush.msra.mxu0 %v331
      %393 = vmatpush.msra.mxu0 %v330
      %394 = vmatmul.f32.gmra.mxu0 %v346
      %v395 = vpop.f32.mrf.mxu0
      %v396 = vadd.f32 %v362, %v395
      %397 = vmatmul.f32.gmra.mxu0 %v347
      %v398 = vpop.f32.mrf.mxu0
      %v399 = vadd.f32 %v363, %v398
      %400 = vmatmul.f32.gmra.mxu0 %v348
      %v401 = vpop.f32.mrf.mxu0
      %v402 = vadd.f32 %v364, %v401
      %403 = vmatmul.f32.gmra.mxu0 %v349
      %v404 = vpop.f32.mrf.mxu0
      %v405 = vadd.f32 %v365, %v404
      %406 = vmatmul.f32.gmra.mxu0 %v350
      %v407 = vpop.f32.mrf.mxu0
      %v408 = vadd.f32 %v366, %v407
      %409 = vmatmul.f32.gmra.mxu0 %v351
      %v410 = vpop.f32.mrf.mxu0
      %v411 = vadd.f32 %v367, %v410
      %412 = vmatmul.f32.gmra.mxu0 %v352
      %v413 = vpop.f32.mrf.mxu0
      %v414 = vadd.f32 %v368, %v413
      %415 = vmatmul.f32.gmra.mxu0 %v353
      %v416 = vpop.f32.mrf.mxu0
      %v417 = vadd.f32 %v369, %v416
      %418 = vmatmul.f32.gmra.mxu0 %v354
      %v419 = vpop.f32.mrf.mxu0
      %v420 = vadd.f32 %v370, %v419
      %421 = vmatmul.f32.gmra.mxu0 %v355
      %v422 = vpop.f32.mrf.mxu0
      %v423 = vadd.f32 %v371, %v422
      %424 = vmatmul.f32.gmra.mxu0 %v356
      %v425 = vpop.f32.mrf.mxu0
      %v426 = vadd.f32 %v372, %v425
      %427 = vmatmul.f32.gmra.mxu0 %v357
      %v428 = vpop.f32.mrf.mxu0
      %v429 = vadd.f32 %v373, %v428
      %430 = vmatmul.f32.gmra.mxu0 %v358
      %v431 = vpop.f32.mrf.mxu0
      %v432 = vadd.f32 %v374, %v431
      %433 = vmatmul.f32.gmra.mxu0 %v359
      %v434 = vpop.f32.mrf.mxu0
      %v435 = vadd.f32 %v375, %v434
      %436 = vmatmul.f32.gmra.mxu0 %v360
      %v437 = vpop.f32.mrf.mxu0
      %v438 = vadd.f32 %v376, %v437
      %439 = vmatmul.f32.gmra.mxu0 %v361
      %v440 = vpop.f32.mrf.mxu0
      %v441 = vadd.f32 %v377, %v440
      %442 = vdwg.mxu0
      %v443 = vld [vmem:[%s284] sm:$0xff]
      %v444 = vld [vmem:[%s284 + $0x8] sm:$0xff]
      %v445 = vld [vmem:[%s284 + $0x10] sm:$0xff]
      %v446 = vld [vmem:[%s284 + $0x18] sm:$0xff]
      %v447 = vld [vmem:[%s284 + $0x20] sm:$0xff]
      %v448 = vld [vmem:[%s284 + $0x28] sm:$0xff]
      %v449 = vld [vmem:[%s284 + $0x30] sm:$0xff]
      %v450 = vld [vmem:[%s284 + $0x38] sm:$0xff]
      %v451 = vld [vmem:[%s284 + $0x40] sm:$0xff]
      %v452 = vld [vmem:[%s284 + $0x48] sm:$0xff]
      %v453 = vld [vmem:[%s284 + $0x50] sm:$0xff]
      %v454 = vld [vmem:[%s284 + $0x58] sm:$0xff]
      %v455 = vld [vmem:[%s284 + $0x60] sm:$0xff]
      %v456 = vld [vmem:[%s284 + $0x68] sm:$0xff]
      %v457 = vld [vmem:[%s284 + $0x70] sm:$0xff]
      %v458 = vld [vmem:[%s284 + $0x78] sm:$0xff]
      %v459 = vld [vmem:[%s293] sm:$0x1]
      %v460 = vperm.slane %v459, 0
      %461 = vmatpush.msra.mxu0 %v458
      %462 = vmatpush.msra.mxu0 %v457
      %463 = vmatpush.msra.mxu0 %v456
      %464 = vmatpush.msra.mxu0 %v455
      %465 = vmatpush.msra.mxu0 %v454
      %466 = vmatpush.msra.mxu0 %v453
      %467 = vmatpush.msra.mxu0 %v452
      %468 = vmatpush.msra.mxu0 %v451
      %469 = vmatpush.msra.mxu0 %v450
      %470 = vmatpush.msra.mxu0 %v449
      %471 = vmatpush.msra.mxu0 %v448
      %472 = vmatpush.msra.mxu0 %v447
      %473 = vmatpush.msra.mxu0 %v446
      %474 = vmatpush.msra.mxu0 %v445
      %475 = vmatpush.msra.mxu0 %v444
      %476 = vmatpush.msra.mxu0 %v443
      %477 = vmatmul.f32.gmra.mxu0 %v396
      %v478 = vpop.f32.mrf.mxu0
      %v479 = vadd.f32 %v460, %v478
      %480 = vmatmul.f32.gmra.mxu0 %v399
      %v481 = vpop.f32.mrf.mxu0
      %v482 = vadd.f32 %v460, %v481
      %483 = vmatmul.f32.gmra.mxu0 %v402
      %v484 = vpop.f32.mrf.mxu0
      %v485 = vadd.f32 %v460, %v484
      %486 = vmatmul.f32.gmra.mxu0 %v405
      %v487 = vpop.f32.mrf.mxu0
      %v488 = vadd.f32 %v460, %v487
      %489 = vmatmul.f32.gmra.mxu0 %v408
      %v490 = vpop.f32.mrf.mxu0
      %v491 = vadd.f32 %v460, %v490
      %492 = vmatmul.f32.gmra.mxu0 %v411
      %v493 = vpop.f32.mrf.mxu0
      %v494 = vadd.f32 %v460, %v493
      %495 = vmatmul.f32.gmra.mxu0 %v414
      %v496 = vpop.f32.mrf.mxu0
      %v497 = vadd.f32 %v460, %v496
      %498 = vmatmul.f32.gmra.mxu0 %v417
      %v499 = vpop.f32.mrf.mxu0
      %v500 = vadd.f32 %v460, %v499
      %501 = vmatmul.f32.gmra.mxu0 %v420
      %v502 = vpop.f32.mrf.mxu0
      %v503 = vadd.f32 %v460, %v502
      %504 = vmatmul.f32.gmra.mxu0 %v423
      %v505 = vpop.f32.mrf.mxu0
      %v506 = vadd.f32 %v460, %v505
      %507 = vmatmul.f32.gmra.mxu0 %v426
      %v508 = vpop.f32.mrf.mxu0
      %v509 = vadd.f32 %v460, %v508
      %510 = vmatmul.f32.gmra.mxu0 %v429
      %v511 = vpop.f32.mrf.mxu0
      %v512 = vadd.f32 %v460, %v511
      %513 = vmatmul.f32.gmra.mxu0 %v432
      %v514 = vpop.f32.mrf.mxu0
      %v515 = vadd.f32 %v460, %v514
      %516 = vmatmul.f32.gmra.mxu0 %v435
      %v517 = vpop.f32.mrf.mxu0
      %v518 = vadd.f32 %v460, %v517
      %519 = vmatmul.f32.gmra.mxu0 %v438
      %v520 = vpop.f32.mrf.mxu0
      %v521 = vadd.f32 %v460, %v520
      %522 = vmatmul.f32.gmra.mxu0 %v441
      %v523 = vpop.f32.mrf.mxu0
      %v524 = vadd.f32 %v460, %v523
      %525 = vdwg.mxu0
      %v526 = vmax.f32 %v479, 0.0
      %v527 = vmax.f32 %v482, 0.0
      %v528 = vmax.f32 %v485, 0.0
      %v529 = vmax.f32 %v488, 0.0
      %v530 = vmax.f32 %v491, 0.0
      %v531 = vmax.f32 %v494, 0.0
      %v532 = vmax.f32 %v497, 0.0
      %v533 = vmax.f32 %v500, 0.0
      %v534 = vmax.f32 %v503, 0.0
      %v535 = vmax.f32 %v506, 0.0
      %v536 = vmax.f32 %v509, 0.0
      %v537 = vmax.f32 %v512, 0.0
      %v538 = vmax.f32 %v515, 0.0
      %v539 = vmax.f32 %v518, 0.0
      %v540 = vmax.f32 %v521, 0.0
      %v541 = vmax.f32 %v524, 0.0
      %v542 = vld [vmem:[%s289] sm:$0xff]
      %v543 = vld [vmem:[%s289 + $0x8] sm:$0xff]
      %v544 = vld [vmem:[%s289 + $0x10] sm:$0xff]
      %v545 = vld [vmem:[%s289 + $0x18] sm:$0xff]
      %v546 = vld [vmem:[%s289 + $0x20] sm:$0xff]
      %v547 = vld [vmem:[%s289 + $0x28] sm:$0xff]
      %v548 = vld [vmem:[%s289 + $0x30] sm:$0xff]
      %v549 = vld [vmem:[%s289 + $0x38] sm:$0xff]
      %v550 = vld [vmem:[%s289 + $0x40] sm:$0xff]
      %v551 = vld [vmem:[%s289 + $0x48] sm:$0xff]
      %v552 = vld [vmem:[%s289 + $0x50] sm:$0xff]
      %v553 = vld [vmem:[%s289 + $0x58] sm:$0xff]
      %v554 = vld [vmem:[%s289 + $0x60] sm:$0xff]
      %v555 = vld [vmem:[%s289 + $0x68] sm:$0xff]
      %v556 = vld [vmem:[%s289 + $0x70] sm:$0xff]
      %v557 = vld [vmem:[%s289 + $0x78] sm:$0xff]
      %v558 = vld [vmem:[%s293 + $0x1] sm:$0x1]
      %v559 = vperm.slane %v558, 0
      %560 = vmatpush.msra.mxu0 %v557
      %561 = vmatpush.msra.mxu0 %v556
      %562 = vmatpush.msra.mxu0 %v555
      %563 = vmatpush.msra.mxu0 %v554
      %564 = vmatpush.msra.mxu0 %v553
      %565 = vmatpush.msra.mxu0 %v552
      %566 = vmatpush.msra.mxu0 %v551
      %567 = vmatpush.msra.mxu0 %v550
      %568 = vmatpush.msra.mxu0 %v549
      %569 = vmatpush.msra.mxu0 %v548
      %570 = vmatpush.msra.mxu0 %v547
      %571 = vmatpush.msra.mxu0 %v546
      %572 = vmatpush.msra.mxu0 %v545
      %573 = vmatpush.msra.mxu0 %v544
      %574 = vmatpush.msra.mxu0 %v543
      %575 = vmatpush.msra.mxu0 %v542
      %576 = vmatmul.f32.gmra.mxu0 %v526
      %v577 = vpop.f32.mrf.mxu0
      %v578 = vadd.f32 %v559, %v577
      %579 = vmatmul.f32.gmra.mxu0 %v527
      %v580 = vpop.f32.mrf.mxu0
      %v581 = vadd.f32 %v559, %v580
      %582 = vmatmul.f32.gmra.mxu0 %v528
      %v583 = vpop.f32.mrf.mxu0
      %v584 = vadd.f32 %v559, %v583
      %585 = vmatmul.f32.gmra.mxu0 %v529
      %v586 = vpop.f32.mrf.mxu0
      %v587 = vadd.f32 %v559, %v586
      %588 = vmatmul.f32.gmra.mxu0 %v530
      %v589 = vpop.f32.mrf.mxu0
      %v590 = vadd.f32 %v559, %v589
      %591 = vmatmul.f32.gmra.mxu0 %v531
      %v592 = vpop.f32.mrf.mxu0
      %v593 = vadd.f32 %v559, %v592
      %594 = vmatmul.f32.gmra.mxu0 %v532
      %v595 = vpop.f32.mrf.mxu0
      %v596 = vadd.f32 %v559, %v595
      %597 = vmatmul.f32.gmra.mxu0 %v533
      %v598 = vpop.f32.mrf.mxu0
      %v599 = vadd.f32 %v559, %v598
      %600 = vmatmul.f32.gmra.mxu0 %v534
      %v601 = vpop.f32.mrf.mxu0
      %v602 = vadd.f32 %v559, %v601
      %603 = vmatmul.f32.gmra.mxu0 %v535
      %v604 = vpop.f32.mrf.mxu0
      %v605 = vadd.f32 %v559, %v604
      %606 = vmatmul.f32.gmra.mxu0 %v536
      %v607 = vpop.f32.mrf.mxu0
      %v608 = vadd.f32 %v559, %v607
      %609 = vmatmul.f32.gmra.mxu0 %v537
      %v610 = vpop.f32.mrf.mxu0
      %v611 = vadd.f32 %v559, %v610
      %612 = vmatmul.f32.gmra.mxu0 %v538
      %v613 = vpop.f32.mrf.mxu0
      %v614 = vadd.f32 %v559, %v613
      %615 = vmatmul.f32.gmra.mxu0 %v539
      %v616 = vpop.f32.mrf.mxu0
      %v617 = vadd.f32 %v559, %v616
      %618 = vmatmul.f32.gmra.mxu0 %v540
      %v619 = vpop.f32.mrf.mxu0
      %v620 = vadd.f32 %v559, %v619
      %621 = vmatmul.f32.gmra.mxu0 %v541
      %v622 = vpop.f32.mrf.mxu0
      %v623 = vadd.f32 %v559, %v622
      %624 = vdwg.mxu0
      %p625 = scmp.ne.s32.totalorder %s17, 1
      // Predicated region
      $region49: #{gnn_node_representation.1} parent=43 // pred_check
        %p626 = pneg %p625
      $region50: #{gnn_node_representation.1} parent=43 // pred_check_branch
        %628 = sbr.rel (%p626) target = $region52
      $region51: #{gnn_node_representation.1} parent=43 // pred_region
        %v629 = vmax.f32 %v578, 0.0
        %v630 = vmax.f32 %v581, 0.0
        %v631 = vmax.f32 %v584, 0.0
        %v632 = vmax.f32 %v587, 0.0
        %v633 = vmax.f32 %v590, 0.0
        %v634 = vmax.f32 %v593, 0.0
        %v635 = vmax.f32 %v596, 0.0
        %v636 = vmax.f32 %v599, 0.0
        %v637 = vmax.f32 %v602, 0.0
        %v638 = vmax.f32 %v605, 0.0
        %v639 = vmax.f32 %v608, 0.0
        %v640 = vmax.f32 %v611, 0.0
        %v641 = vmax.f32 %v614, 0.0
        %v642 = vmax.f32 %v617, 0.0
        %v643 = vmax.f32 %v620, 0.0
        %v644 = vmax.f32 %v623, 0.0
        %645 = vst [vmem:[%s6] sm:$0xff] %v629
        %646 = vst [vmem:[%s6 + $0x8] sm:$0xff] %v630
        %647 = vst [vmem:[%s6 + $0x10] sm:$0xff] %v631
        %648 = vst [vmem:[%s6 + $0x18] sm:$0xff] %v632
        %649 = vst [vmem:[%s6 + $0x20] sm:$0xff] %v633
        %650 = vst [vmem:[%s6 + $0x28] sm:$0xff] %v634
        %651 = vst [vmem:[%s6 + $0x30] sm:$0xff] %v635
        %652 = vst [vmem:[%s6 + $0x38] sm:$0xff] %v636
        %653 = vst [vmem:[%s6 + $0x40] sm:$0xff] %v637
        %654 = vst [vmem:[%s6 + $0x48] sm:$0xff] %v638
        %655 = vst [vmem:[%s6 + $0x50] sm:$0xff] %v639
        %656 = vst [vmem:[%s6 + $0x58] sm:$0xff] %v640
        %657 = vst [vmem:[%s6 + $0x60] sm:$0xff] %v641
        %658 = vst [vmem:[%s6 + $0x68] sm:$0xff] %v642
        %659 = vst [vmem:[%s6 + $0x70] sm:$0xff] %v643
        %660 = vst [vmem:[%s6 + $0x78] sm:$0xff] %v644
      $region52: #{gnn_node_representation.1} parent=43 // pred_fallthru
        _
      %p661 = scmp.eq.s32.totalorder %s17, 1
      // Predicated region
      $region53: #{gnn_node_representation.1} parent=43 // pred_check
        %p662 = pneg %p661
      $region54: #{gnn_node_representation.1} parent=43 // pred_check_branch
        %664 = sbr.rel (%p662) target = $region56
      $region55: #{gnn_node_representation.1} parent=43 // pred_region
        %665 = vst [vmem:[%s6] sm:$0xff] %v578
        %666 = vst [vmem:[%s6 + $0x8] sm:$0xff] %v581
        %667 = vst [vmem:[%s6 + $0x10] sm:$0xff] %v584
        %668 = vst [vmem:[%s6 + $0x18] sm:$0xff] %v587
        %669 = vst [vmem:[%s6 + $0x20] sm:$0xff] %v590
        %670 = vst [vmem:[%s6 + $0x28] sm:$0xff] %v593
        %671 = vst [vmem:[%s6 + $0x30] sm:$0xff] %v596
        %672 = vst [vmem:[%s6 + $0x38] sm:$0xff] %v599
        %673 = vst [vmem:[%s6 + $0x40] sm:$0xff] %v602
        %674 = vst [vmem:[%s6 + $0x48] sm:$0xff] %v605
        %675 = vst [vmem:[%s6 + $0x50] sm:$0xff] %v608
        %676 = vst [vmem:[%s6 + $0x58] sm:$0xff] %v611
        %677 = vst [vmem:[%s6 + $0x60] sm:$0xff] %v614
        %678 = vst [vmem:[%s6 + $0x68] sm:$0xff] %v617
        %679 = vst [vmem:[%s6 + $0x70] sm:$0xff] %v620
        %680 = vst [vmem:[%s6 + $0x78] sm:$0xff] %v623
      $region56: #{gnn_node_representation.1} parent=43 // pred_fallthru
        _
      // Predicated region
      $region57: #{gnn_node_representation.1} parent=43 // pred_check
        %p681 = pneg %p176
      $region58: #{gnn_node_representation.1} parent=43 // pred_check_branch
        %683 = sbr.rel (%p681) target = $region60
      $region59: #{gnn_node_representation.1} parent=43 // pred_region
        _
      $region60: #{gnn_node_representation.1} parent=43 // pred_fallthru
        _
      // Predicated region
      $region61: #{gnn_node_representation.1} parent=43 // pred_check
        %p684 = pneg %p176
      $region62: #{gnn_node_representation.1} parent=43 // pred_check_branch
        %686 = sbr.rel (%p684) target = $region64
      $region63: #{gnn_node_representation.1} parent=43 // pred_region
        _
      $region64: #{gnn_node_representation.1} parent=43 // pred_fallthru
        _
    $region44: #{gnn_node_representation.1} parent=5 // pred_fallthru
      _
    %p687 = scmp.le.s32.totalorder 2, %s12
    // Predicated region
    $region65: #{gnn_node_representation.1} parent=5 // pred_check
      %p688 = pneg %p687
    $region66: #{gnn_node_representation.1} parent=5 // pred_check_branch
      %690 = sbr.rel (%p688) target = $region68
    $region67: #{gnn_node_representation.1} parent=5 // pred_region
      %s691 = ssub.s32 %s12, 2
    $region68: #{gnn_node_representation.1} parent=5 // pred_fallthru
      _
  $region6: #{gnn_node_representation.1} parent=0 // loop_footer
    %s16 = sadd.s32 1, %s12
  $region7: #{gnn_node_representation.1} parent=0 // loop_footer_branch
    %11 = sbr.rel target = $region3
  $region8: #{gnn_node_representation.1} parent=0 // loop_exit
    _

// kernel: gnn_node_representation.1
$region0: #{gnn_node_representation.1}
  #allocation0 [shape = 'u32[]', space=smem, size = 0x4, offset = 0x4, fixed_abs, tag = 'smem constant byte address 0x4 - core index']
  #allocation1 [shape = 'u32[72,128]{1,0:T(1,128)}', space=vmem, size = 0x9000, scoped, tag = 'internal scratch']
  %s0 = inlined_call_operand.vmem [shape: f32[128,128], index: 0, kind: input, shape index: {}]
  %s1 = inlined_call_operand.vmem [shape: f32[128,128], index: 1, kind: input, shape index: {}]
  %s2 = inlined_call_operand.vmem [shape: f32[2,128,128], index: 2, kind: input, shape index: {}]
  %s3 = inlined_call_operand.vmem [shape: f32[2,128,128], index: 3, kind: input, shape index: {}]
  %s4 = inlined_call_operand.vmem [shape: f32[2,128,128], index: 4, kind: input, shape index: {}]
  %s5 = inlined_call_operand.vmem [shape: f32[2,2,128], index: 5, kind: input, shape index: {}]
  %s6 = inlined_call_operand.vmem [shape: f32[128,128], index: 6, kind: output, shape index: {}]
  %s7 = sld [smem:[#allocation0]]
  $region69: #{gnn_node_representation.1} parent=0
    _
  %s9 = ssub.s32 1, %s7
  %s10 = scalar_select 0, %s9, %s7
  loop: start=0, step=1, limit=4
  $region2: #{gnn_node_representation.1} parent=0 // loop_pre_header
    _
  $region3: #{gnn_node_representation.1} parent=0 // loop_header
    %s12 = sphi 0, %s16
    %p13 = scmp.ge.s32.totalorder %s12, 4
    %s20 = sphi 0, %s20
    %s22 = sphi 0, %s20
    %s23 = sphi 0, %s22
    %s37 = sphi 0, %s23
    %s41 = sphi 0, %s41
    %s43 = sphi 0, %s41
    %s44 = sphi 0, %s43
    %s58 = sphi 0, %s44
    %s64 = sphi 0, %s66
    %s67 = sphi 0, %s64
    %s68 = sphi 0, %s67
    %s84 = sphi 0, %s68
    %s90 = sphi 0, %s92
    %s93 = sphi 0, %s90
    %s94 = sphi 0, %s93
    %s110 = sphi 0, %s94
    %s116 = sphi 0, %s118
    %s119 = sphi 0, %s116
    %s120 = sphi 0, %s119
    %s136 = sphi 0, %s120
    %s142 = sphi 0, %s144
    %s145 = sphi 0, %s142
    %s146 = sphi 0, %s145
    %s162 = sphi 0, %s146
    %s166 = sphi 0, %s166
    %s168 = sphi 0, %s166
    %s169 = sphi 0, %s168
    %s183 = sphi 0, %s169
  $region4: #{gnn_node_representation.1} parent=0 // loop_header_branch
    %15 = sbr.rel (%p13) target = $region8
  $region5: #{gnn_node_representation.1} parent=0 // loop_body
    %s17 = ssub.s32 %s12, 1
    %s18 = ssub.s32 %s12, 2
    %s19 = sadd.s32 %s12, 1
    %s21 = sadd.s32 %s20, 1
    %p24 = scmp.eq.s32.totalorder %s12, 1
    %p25 = scmp.ne.s32.totalorder %s20, %s22
    %p26 = scmp.eq.s32.totalorder %s12, 0
    %p27 = por %p25, %p26
    %p28 = scmp.ne.s32.totalorder %s20, %s22
    %p29 = scmp.eq.s32.totalorder %s17, 1
    %p30 = por %p28, %p29
    %p31 = scmp.ne.s32.totalorder %s22, %s23
    %p32 = scmp.eq.s32.totalorder %s17, 0
    %p33 = por %p31, %p32
    %p34 = scmp.ne.s32.totalorder %s22, %s23
    %p35 = scmp.eq.s32.totalorder %s18, 1
    %p36 = por %p34, %p35
    %p38 = scmp.ne.s32.totalorder %s23, %s37
    %p39 = scmp.eq.s32.totalorder %s18, 0
    %p40 = por %p38, %p39
    %s42 = sadd.s32 %s41, 1
    %p45 = scmp.eq.s32.totalorder %s12, 1
    %p46 = scmp.ne.s32.totalorder %s41, %s43
    %p47 = scmp.eq.s32.totalorder %s12, 0
    %p48 = por %p46, %p47
    %p49 = scmp.ne.s32.totalorder %s41, %s43
    %p50 = scmp.eq.s32.totalorder %s17, 1
    %p51 = por %p49, %p50
    %p52 = scmp.ne.s32.totalorder %s43, %s44
    %p53 = scmp.eq.s32.totalorder %s17, 0
    %p54 = por %p52, %p53
    %p55 = scmp.ne.s32.totalorder %s43, %s44
    %p56 = scmp.eq.s32.totalorder %s18, 1
    %p57 = por %p55, %p56
    %p59 = scmp.ne.s32.totalorder %s44, %s58
    %p60 = scmp.eq.s32.totalorder %s18, 0
    %p61 = por %p59, %p60
    %s62 = ssub.s32 %s12, %s19
    %p63 = scmp.eq.s32.totalorder %s62, 0
    %s65 = sadd.s32 %s64, 1
    %s66 = scalar_select %p63, %s64, %s65
    %p69 = pneg %p63
    %p70 = scmp.eq.s32.totalorder %s12, 1
    %p71 = por %p69, %p70
    %p72 = scmp.ne.s32.totalorder %s64, %s67
    %p73 = scmp.eq.s32.totalorder %s12, 0
    %p74 = por %p72, %p73
    %p75 = scmp.ne.s32.totalorder %s64, %s67
    %p76 = scmp.eq.s32.totalorder %s17, 1
    %p77 = por %p75, %p76
    %p78 = scmp.ne.s32.totalorder %s67, %s68
    %p79 = scmp.eq.s32.totalorder %s17, 0
    %p80 = por %p78, %p79
    %p81 = scmp.ne.s32.totalorder %s67, %s68
    %p82 = scmp.eq.s32.totalorder %s18, 1
    %p83 = por %p81, %p82
    %p85 = scmp.ne.s32.totalorder %s68, %s84
    %p86 = scmp.eq.s32.totalorder %s18, 0
    %p87 = por %p85, %p86
    %s88 = ssub.s32 %s12, %s19
    %p89 = scmp.eq.s32.totalorder %s88, 0
    %s91 = sadd.s32 %s90, 1
    %s92 = scalar_select %p89, %s90, %s91
    %p95 = pneg %p89
    %p96 = scmp.eq.s32.totalorder %s12, 1
    %p97 = por %p95, %p96
    %p98 = scmp.ne.s32.totalorder %s90, %s93
    %p99 = scmp.eq.s32.totalorder %s12, 0
    %p100 = por %p98, %p99
    %p101 = scmp.ne.s32.totalorder %s90, %s93
    %p102 = scmp.eq.s32.totalorder %s17, 1
    %p103 = por %p101, %p102
    %p104 = scmp.ne.s32.totalorder %s93, %s94
    %p105 = scmp.eq.s32.totalorder %s17, 0
    %p106 = por %p104, %p105
    %p107 = scmp.ne.s32.totalorder %s93, %s94
    %p108 = scmp.eq.s32.totalorder %s18, 1
    %p109 = por %p107, %p108
    %p111 = scmp.ne.s32.totalorder %s94, %s110
    %p112 = scmp.eq.s32.totalorder %s18, 0
    %p113 = por %p111, %p112
    %s114 = ssub.s32 %s12, %s19
    %p115 = scmp.eq.s32.totalorder %s114, 0
    %s117 = sadd.s32 %s116, 1
    %s118 = scalar_select %p115, %s116, %s117
    %p121 = pneg %p115
    %p122 = scmp.eq.s32.totalorder %s12, 1
    %p123 = por %p121, %p122
    %p124 = scmp.ne.s32.totalorder %s116, %s119
    %p125 = scmp.eq.s32.totalorder %s12, 0
    %p126 = por %p124, %p125
    %p127 = scmp.ne.s32.totalorder %s116, %s119
    %p128 = scmp.eq.s32.totalorder %s17, 1
    %p129 = por %p127, %p128
    %p130 = scmp.ne.s32.totalorder %s119, %s120
    %p131 = scmp.eq.s32.totalorder %s17, 0
    %p132 = por %p130, %p131
    %p133 = scmp.ne.s32.totalorder %s119, %s120
    %p134 = scmp.eq.s32.totalorder %s18, 1
    %p135 = por %p133, %p134
    %p137 = scmp.ne.s32.totalorder %s120, %s136
    %p138 = scmp.eq.s32.totalorder %s18, 0
    %p139 = por %p137, %p138
    %s140 = ssub.s32 %s12, %s19
    %p141 = scmp.eq.s32.totalorder %s140, 0
    %s143 = sadd.s32 %s142, 1
    %s144 = scalar_select %p141, %s142, %s143
    %p147 = pneg %p141
    %p148 = scmp.eq.s32.totalorder %s12, 1
    %p149 = por %p147, %p148
    %p150 = scmp.ne.s32.totalorder %s142, %s145
    %p151 = scmp.eq.s32.totalorder %s12, 0
    %p152 = por %p150, %p151
    %p153 = scmp.ne.s32.totalorder %s142, %s145
    %p154 = scmp.eq.s32.totalorder %s17, 1
    %p155 = por %p153, %p154
    %p156 = scmp.ne.s32.totalorder %s145, %s146
    %p157 = scmp.eq.s32.totalorder %s17, 0
    %p158 = por %p156, %p157
    %p159 = scmp.ne.s32.totalorder %s145, %s146
    %p160 = scmp.eq.s32.totalorder %s18, 1
    %p161 = por %p159, %p160
    %p163 = scmp.ne.s32.totalorder %s146, %s162
    %p164 = scmp.eq.s32.totalorder %s18, 0
    %p165 = por %p163, %p164
    %s167 = sadd.s32 %s166, 1
    %p170 = scmp.eq.s32.totalorder %s12, 1
    %p171 = scmp.ne.s32.totalorder %s166, %s168
    %p172 = scmp.eq.s32.totalorder %s12, 0
    %p173 = por %p171, %p172
    %p174 = scmp.ne.s32.totalorder %s166, %s168
    %p175 = scmp.eq.s32.totalorder %s17, 1
    %p176 = por %p174, %p175
    %p177 = scmp.ne.s32.totalorder %s168, %s169
    %p178 = scmp.eq.s32.totalorder %s17, 0
    %p179 = por %p177, %p178
    %p180 = scmp.ne.s32.totalorder %s168, %s169
    %p181 = scmp.eq.s32.totalorder %s18, 1
    %p182 = por %p180, %p181
    %p184 = scmp.ne.s32.totalorder %s169, %s183
    %p185 = scmp.eq.s32.totalorder %s18, 0
    %p186 = por %p184, %p185
    %p187 = scmp.le.s32.totalorder 1, %s12
    %p188 = scmp.lt.s32.totalorder %s12, 3
    %p189 = pnand %p187, %p188
    %p190 = pneg %p189
    // Predicated region
    $region9: #{gnn_node_representation.1} parent=5 // pred_check
      _
    $region10: #{gnn_node_representation.1} parent=5 // pred_check_branch
      %192 = sbr.rel (%p189) target = $region12
    $region11: #{gnn_node_representation.1} parent=5 // pred_region
      %s193 = ssub.s32 %s12, 1
      // Predicated region
      $region13: #{gnn_node_representation.1} parent=11 // pred_check
        %p194 = pneg %p33
      $region14: #{gnn_node_representation.1} parent=11 // pred_check_branch
        %196 = sbr.rel (%p194) target = $region16
      $region15: #{gnn_node_representation.1} parent=11 // pred_region
        _
      $region16: #{gnn_node_representation.1} parent=11 // pred_fallthru
        _
      // Predicated region
      $region17: #{gnn_node_representation.1} parent=11 // pred_check
        %p197 = pneg %p54
      $region18: #{gnn_node_representation.1} parent=11 // pred_check_branch
        %199 = sbr.rel (%p197) target = $region20
      $region19: #{gnn_node_representation.1} parent=11 // pred_region
        _
      $region20: #{gnn_node_representation.1} parent=11 // pred_fallthru
        _
    $region12: #{gnn_node_representation.1} parent=5 // pred_fallthru
      _
    %p200 = scmp.lt.s32.totalorder %s12, 2
    // Predicated region
    $region21: #{gnn_node_representation.1} parent=5 // pred_check
      %p201 = pneg %p200
    $region22: #{gnn_node_representation.1} parent=5 // pred_check_branch
      %203 = sbr.rel (%p201) target = $region24
    $region23: #{gnn_node_representation.1} parent=5 // pred_region
      // Predicated region
      $region25: #{gnn_node_representation.1} parent=23 // pred_check
        %p204 = pneg %p74
      $region26: #{gnn_node_representation.1} parent=23 // pred_check_branch
        %206 = sbr.rel (%p204) target = $region28
      $region27: #{gnn_node_representation.1} parent=23 // pred_region
        %p207 = scmp.lt.s32.totalorder %s12, 1
        %s208 = scalar_select %p207, %s12, 1
        %s209 = smul.addr %s208, 16
        %s210 = smul.addr %s209, 8
        %s211 = scalar_lea.vmem %s2, %s210
      $region28: #{gnn_node_representation.1} parent=23 // pred_fallthru
        _
      // Predicated region
      $region29: #{gnn_node_representation.1} parent=23 // pred_check
        %p212 = pneg %p100
      $region30: #{gnn_node_representation.1} parent=23 // pred_check_branch
        %214 = sbr.rel (%p212) target = $region32
      $region31: #{gnn_node_representation.1} parent=23 // pred_region
        %p215 = scmp.lt.s32.totalorder %s12, 1
        %s216 = scalar_select %p215, %s12, 1
        %s217 = smul.addr %s216, 16
        %s218 = smul.addr %s217, 8
        %s219 = scalar_lea.vmem %s3, %s218
      $region32: #{gnn_node_representation.1} parent=23 // pred_fallthru
        _
      // Predicated region
      $region33: #{gnn_node_representation.1} parent=23 // pred_check
        %p220 = pneg %p126
      $region34: #{gnn_node_representation.1} parent=23 // pred_check_branch
        %222 = sbr.rel (%p220) target = $region36
      $region35: #{gnn_node_representation.1} parent=23 // pred_region
        %p223 = scmp.lt.s32.totalorder %s12, 1
        %s224 = scalar_select %p223, %s12, 1
        %s225 = smul.addr %s224, 16
        %s226 = smul.addr %s225, 8
        %s227 = scalar_lea.vmem %s4, %s226
      $region36: #{gnn_node_representation.1} parent=23 // pred_fallthru
        _
      // Predicated region
      $region37: #{gnn_node_representation.1} parent=23 // pred_check
        %p228 = pneg %p152
      $region38: #{gnn_node_representation.1} parent=23 // pred_check_branch
        %230 = sbr.rel (%p228) target = $region40
      $region39: #{gnn_node_representation.1} parent=23 // pred_region
        %p231 = scmp.lt.s32.totalorder %s12, 1
        %s232 = scalar_select %p231, %s12, 1
        %s233 = smul.addr %s232, 2
        %s234 = scalar_lea.vmem %s5, %s233
      $region40: #{gnn_node_representation.1} parent=23 // pred_fallthru
        _
    $region24: #{gnn_node_representation.1} parent=5 // pred_fallthru
      _
    %p235 = scmp.le.s32.totalorder 1, %s12
    %p236 = scmp.lt.s32.totalorder %s12, 3
    %p237 = pnand %p235, %p236
    %p238 = pneg %p237
    // Predicated region
    $region41: #{gnn_node_representation.1} parent=5 // pred_check
      _
    $region42: #{gnn_node_representation.1} parent=5 // pred_check_branch
      %240 = sbr.rel (%p237) target = $region44
    $region43: #{gnn_node_representation.1} parent=5 // pred_region
      %s241 = ssub.s32 %s12, 1
      %p242 = pneg %p33
      %p243 = pneg %p30
      %p244 = pneg %p54
      %p245 = pneg %p51
      %p246 = scmp.lt.s32.totalorder %s17, 1
      %s247 = scalar_select %p246, %s17, 1
      %s248 = smul.addr %s247, 16
      %s249 = smul.addr %s248, 8
      %s250 = scalar_lea.vmem %s2, %s249
      %p251 = pneg %p80
      %p252 = pneg %p77
      %p253 = scmp.lt.s32.totalorder %s17, 1
      %s254 = scalar_select %p253, %s17, 1
      %s255 = smul.addr %s254, 16
      %s256 = smul.addr %s255, 8
      %s257 = scalar_lea.vmem %s3, %s256
      %p258 = pneg %p106
      %p259 = pneg %p103
      %p260 = scmp.lt.s32.totalorder %s17, 1
      %s261 = scalar_select %p260, %s17, 1
      %s262 = smul.addr %s261, 16
      %s263 = smul.addr %s262, 8
      %s264 = scalar_lea.vmem %s4, %s263
      %p265 = pneg %p132
      %p266 = pneg %p129
      %p267 = scmp.lt.s32.totalorder %s17, 1
      %s268 = scalar_select %p267, %s17, 1
      %s269 = smul.addr %s268, 2
      %s270 = scalar_lea.vmem %s5, %s269
      %p271 = pneg %p158
      %p272 = pneg %p155
      %p273 = pneg %p179
      %p274 = pneg %p176
      %p275 = scmp.lt.s32.totalorder %s17, 1
      %s276 = scalar_select %p275, %s17, 1
      %s277 = smul.addr %s276, 16
      %s278 = smul.addr %s277, 8
      %s279 = scalar_lea.vmem %s2, %s278
      %p280 = scmp.lt.s32.totalorder %s17, 1
      %s281 = scalar_select %p280, %s17, 1
      %s282 = smul.addr %s281, 16
      %s283 = smul.addr %s282, 8
      %s284 = scalar_lea.vmem %s3, %s283
      %p285 = scmp.lt.s32.totalorder %s17, 1
      %s286 = scalar_select %p285, %s17, 1
      %s287 = smul.addr %s286, 16
      %s288 = smul.addr %s287, 8
      %s289 = scalar_lea.vmem %s4, %s288
      %p290 = scmp.lt.s32.totalorder %s17, 1
      %s291 = scalar_select %p290, %s17, 1
      %s292 = smul.addr %s291, 2
      %s293 = scalar_lea.vmem %s5, %s292
      %p294 = scmp.eq.s32.totalorder %s17, 0
      // Predicated region
      $region45: #{gnn_node_representation.1} parent=43 // pred_check
        %p295 = pneg %p294
      $region46: #{gnn_node_representation.1} parent=43 // pred_check_branch
        %297 = sbr.rel (%p295) target = $region48
      $region47: #{gnn_node_representation.1} parent=43 // pred_region
        %v298 = vld [vmem:[%s1] sm:$0xff]
        %v299 = vld [vmem:[%s1 + $0x8] sm:$0xff]
        %v300 = vld [vmem:[%s1 + $0x10] sm:$0xff]
        %v301 = vld [vmem:[%s1 + $0x18] sm:$0xff]
        %v302 = vld [vmem:[%s1 + $0x20] sm:$0xff]
        %v303 = vld [vmem:[%s1 + $0x28] sm:$0xff]
        %v304 = vld [vmem:[%s1 + $0x30] sm:$0xff]
        %v305 = vld [vmem:[%s1 + $0x38] sm:$0xff]
        %v306 = vld [vmem:[%s1 + $0x40] sm:$0xff]
        %v307 = vld [vmem:[%s1 + $0x48] sm:$0xff]
        %v308 = vld [vmem:[%s1 + $0x50] sm:$0xff]
        %v309 = vld [vmem:[%s1 + $0x58] sm:$0xff]
        %v310 = vld [vmem:[%s1 + $0x60] sm:$0xff]
        %v311 = vld [vmem:[%s1 + $0x68] sm:$0xff]
        %v312 = vld [vmem:[%s1 + $0x70] sm:$0xff]
        %v313 = vld [vmem:[%s1 + $0x78] sm:$0xff]
        %314 = vst [vmem:[%s6] sm:$0xff] %v298
        %315 = vst [vmem:[%s6 + $0x8] sm:$0xff] %v299
        %316 = vst [vmem:[%s6 + $0x10] sm:$0xff] %v300
        %317 = vst [vmem:[%s6 + $0x18] sm:$0xff] %v301
        %318 = vst [vmem:[%s6 + $0x20] sm:$0xff] %v302
        %319 = vst [vmem:[%s6 + $0x28] sm:$0xff] %v303
        %320 = vst [vmem:[%s6 + $0x30] sm:$0xff] %v304
        %321 = vst [vmem:[%s6 + $0x38] sm:$0xff] %v305
        %322 = vst [vmem:[%s6 + $0x40] sm:$0xff] %v306
        %323 = vst [vmem:[%s6 + $0x48] sm:$0xff] %v307
        %324 = vst [vmem:[%s6 + $0x50] sm:$0xff] %v308
        %325 = vst [vmem:[%s6 + $0x58] sm:$0xff] %v309
        %326 = vst [vmem:[%s6 + $0x60] sm:$0xff] %v310
        %327 = vst [vmem:[%s6 + $0x68] sm:$0xff] %v311
        %328 = vst [vmem:[%s6 + $0x70] sm:$0xff] %v312
        %329 = vst [vmem:[%s6 + $0x78] sm:$0xff] %v313
      $region48: #{gnn_node_representation.1} parent=43 // pred_fallthru
        _
      %v330 = vld [vmem:[%s6] sm:$0xff]
      %v331 = vld [vmem:[%s6 + $0x8] sm:$0xff]
      %v332 = vld [vmem:[%s6 + $0x10] sm:$0xff]
      %v333 = vld [vmem:[%s6 + $0x18] sm:$0xff]
      %v334 = vld [vmem:[%s6 + $0x20] sm:$0xff]
      %v335 = vld [vmem:[%s6 + $0x28] sm:$0xff]
      %v336 = vld [vmem:[%s6 + $0x30] sm:$0xff]
      %v337 = vld [vmem:[%s6 + $0x38] sm:$0xff]
      %v338 = vld [vmem:[%s6 + $0x40] sm:$0xff]
      %v339 = vld [vmem:[%s6 + $0x48] sm:$0xff]
      %v340 = vld [vmem:[%s6 + $0x50] sm:$0xff]
      %v341 = vld [vmem:[%s6 + $0x58] sm:$0xff]
      %v342 = vld [vmem:[%s6 + $0x60] sm:$0xff]
      %v343 = vld [vmem:[%s6 + $0x68] sm:$0xff]
      %v344 = vld [vmem:[%s6 + $0x70] sm:$0xff]
      %v345 = vld [vmem:[%s6 + $0x78] sm:$0xff]
      %v346 = vld [vmem:[%s0] sm:$0xff]
      %v347 = vld [vmem:[%s0 + $0x8] sm:$0xff]
      %v348 = vld [vmem:[%s0 + $0x10] sm:$0xff]
      %v349 = vld [vmem:[%s0 + $0x18] sm:$0xff]
      %v350 = vld [vmem:[%s0 + $0x20] sm:$0xff]
      %v351 = vld [vmem:[%s0 + $0x28] sm:$0xff]
      %v352 = vld [vmem:[%s0 + $0x30] sm:$0xff]
      %v353 = vld [vmem:[%s0 + $0x38] sm:$0xff]
      %v354 = vld [vmem:[%s0 + $0x40] sm:$0xff]
      %v355 = vld [vmem:[%s0 + $0x48] sm:$0xff]
      %v356 = vld [vmem:[%s0 + $0x50] sm:$0xff]
      %v357 = vld [vmem:[%s0 + $0x58] sm:$0xff]
      %v358 = vld [vmem:[%s0 + $0x60] sm:$0xff]
      %v359 = vld [vmem:[%s0 + $0x68] sm:$0xff]
      %v360 = vld [vmem:[%s0 + $0x70] sm:$0xff]
      %v361 = vld [vmem:[%s0 + $0x78] sm:$0xff]
      %v362 = vld [vmem:[%s279] sm:$0xff]
      %v363 = vld [vmem:[%s279 + $0x8] sm:$0xff]
      %v364 = vld [vmem:[%s279 + $0x10] sm:$0xff]
      %v365 = vld [vmem:[%s279 + $0x18] sm:$0xff]
      %v366 = vld [vmem:[%s279 + $0x20] sm:$0xff]
      %v367 = vld [vmem:[%s279 + $0x28] sm:$0xff]
      %v368 = vld [vmem:[%s279 + $0x30] sm:$0xff]
      %v369 = vld [vmem:[%s279 + $0x38] sm:$0xff]
      %v370 = vld [vmem:[%s279 + $0x40] sm:$0xff]
      %v371 = vld [vmem:[%s279 + $0x48] sm:$0xff]
      %v372 = vld [vmem:[%s279 + $0x50] sm:$0xff]
      %v373 = vld [vmem:[%s279 + $0x58] sm:$0xff]
      %v374 = vld [vmem:[%s279 + $0x60] sm:$0xff]
      %v375 = vld [vmem:[%s279 + $0x68] sm:$0xff]
      %v376 = vld [vmem:[%s279 + $0x70] sm:$0xff]
      %v377 = vld [vmem:[%s279 + $0x78] sm:$0xff]
      %378 = vmatpush.msra.mxu0 %v345
      %379 = vmatpush.msra.mxu0 %v344
      %380 = vmatpush.msra.mxu0 %v343
      %381 = vmatpush.msra.mxu0 %v342
      %382 = vmatpush.msra.mxu0 %v341
      %383 = vmatpush.msra.mxu0 %v340
      %384 = vmatpush.msra.mxu0 %v339
      %385 = vmatpush.msra.mxu0 %v338
      %386 = vmatpush.msra.mxu0 %v337
      %387 = vmatpush.msra.mxu0 %v336
      %388 = vmatpush.msra.mxu0 %v335
      %389 = vmatpush.msra.mxu0 %v334
      %390 = vmatpush.msra.mxu0 %v333
      %391 = vmatpush.msra.mxu0 %v332
      %392 = vmatpush.msra.mxu0 %v331
      %393 = vmatpush.msra.mxu0 %v330
      %394 = vmatmul.f32.gmra.mxu0 %v346
      %v395 = vpop.f32.mrf.mxu0
      %v396 = vadd.f32 %v362, %v395
      %397 = vmatmul.f32.gmra.mxu0 %v347
      %v398 = vpop.f32.mrf.mxu0
      %v399 = vadd.f32 %v363, %v398
      %400 = vmatmul.f32.gmra.mxu0 %v348
      %v401 = vpop.f32.mrf.mxu0
      %v402 = vadd.f32 %v364, %v401
      %403 = vmatmul.f32.gmra.mxu0 %v349
      %v404 = vpop.f32.mrf.mxu0
      %v405 = vadd.f32 %v365, %v404
      %406 = vmatmul.f32.gmra.mxu0 %v350
      %v407 = vpop.f32.mrf.mxu0
      %v408 = vadd.f32 %v366, %v407
      %409 = vmatmul.f32.gmra.mxu0 %v351
      %v410 = vpop.f32.mrf.mxu0
      %v411 = vadd.f32 %v367, %v410
      %412 = vmatmul.f32.gmra.mxu0 %v352
      %v413 = vpop.f32.mrf.mxu0
      %v414 = vadd.f32 %v368, %v413
      %415 = vmatmul.f32.gmra.mxu0 %v353
      %v416 = vpop.f32.mrf.mxu0
      %v417 = vadd.f32 %v369, %v416
      %418 = vmatmul.f32.gmra.mxu0 %v354
      %v419 = vpop.f32.mrf.mxu0
      %v420 = vadd.f32 %v370, %v419
      %421 = vmatmul.f32.gmra.mxu0 %v355
      %v422 = vpop.f32.mrf.mxu0
      %v423 = vadd.f32 %v371, %v422
      %424 = vmatmul.f32.gmra.mxu0 %v356
      %v425 = vpop.f32.mrf.mxu0
      %v426 = vadd.f32 %v372, %v425
      %427 = vmatmul.f32.gmra.mxu0 %v357
      %v428 = vpop.f32.mrf.mxu0
      %v429 = vadd.f32 %v373, %v428
      %430 = vmatmul.f32.gmra.mxu0 %v358
      %v431 = vpop.f32.mrf.mxu0
      %v432 = vadd.f32 %v374, %v431
      %433 = vmatmul.f32.gmra.mxu0 %v359
      %v434 = vpop.f32.mrf.mxu0
      %v435 = vadd.f32 %v375, %v434
      %436 = vmatmul.f32.gmra.mxu0 %v360
      %v437 = vpop.f32.mrf.mxu0
      %v438 = vadd.f32 %v376, %v437
      %439 = vmatmul.f32.gmra.mxu0 %v361
      %v440 = vpop.f32.mrf.mxu0
      %v441 = vadd.f32 %v377, %v440
      %442 = vdwg.mxu0
      %v443 = vld [vmem:[%s284] sm:$0xff]
      %v444 = vld [vmem:[%s284 + $0x8] sm:$0xff]
      %v445 = vld [vmem:[%s284 + $0x10] sm:$0xff]
      %v446 = vld [vmem:[%s284 + $0x18] sm:$0xff]
      %v447 = vld [vmem:[%s284 + $0x20] sm:$0xff]
      %v448 = vld [vmem:[%s284 + $0x28] sm:$0xff]
      %v449 = vld [vmem:[%s284 + $0x30] sm:$0xff]
      %v450 = vld [vmem:[%s284 + $0x38] sm:$0xff]
      %v451 = vld [vmem:[%s284 + $0x40] sm:$0xff]
      %v452 = vld [vmem:[%s284 + $0x48] sm:$0xff]
      %v453 = vld [vmem:[%s284 + $0x50] sm:$0xff]
      %v454 = vld [vmem:[%s284 + $0x58] sm:$0xff]
      %v455 = vld [vmem:[%s284 + $0x60] sm:$0xff]
      %v456 = vld [vmem:[%s284 + $0x68] sm:$0xff]
      %v457 = vld [vmem:[%s284 + $0x70] sm:$0xff]
      %v458 = vld [vmem:[%s284 + $0x78] sm:$0xff]
      %v459 = vld [vmem:[%s293] sm:$0x1]
      %v460 = vperm.slane %v459, 0
      %461 = vmatpush.msra.mxu0 %v458
      %462 = vmatpush.msra.mxu0 %v457
      %463 = vmatpush.msra.mxu0 %v456
      %464 = vmatpush.msra.mxu0 %v455
      %465 = vmatpush.msra.mxu0 %v454
      %466 = vmatpush.msra.mxu0 %v453
      %467 = vmatpush.msra.mxu0 %v452
      %468 = vmatpush.msra.mxu0 %v451
      %469 = vmatpush.msra.mxu0 %v450
      %470 = vmatpush.msra.mxu0 %v449
      %471 = vmatpush.msra.mxu0 %v448
      %472 = vmatpush.msra.mxu0 %v447
      %473 = vmatpush.msra.mxu0 %v446
      %474 = vmatpush.msra.mxu0 %v445
      %475 = vmatpush.msra.mxu0 %v444
      %476 = vmatpush.msra.mxu0 %v443
      %477 = vmatmul.f32.gmra.mxu0 %v396
      %v478 = vpop.f32.mrf.mxu0
      %v479 = vadd.f32 %v460, %v478
      %480 = vmatmul.f32.gmra.mxu0 %v399
      %v481 = vpop.f32.mrf.mxu0
      %v482 = vadd.f32 %v460, %v481
      %483 = vmatmul.f32.gmra.mxu0 %v402
      %v484 = vpop.f32.mrf.mxu0
      %v485 = vadd.f32 %v460, %v484
      %486 = vmatmul.f32.gmra.mxu0 %v405
      %v487 = vpop.f32.mrf.mxu0
      %v488 = vadd.f32 %v460, %v487
      %489 = vmatmul.f32.gmra.mxu0 %v408
      %v490 = vpop.f32.mrf.mxu0
      %v491 = vadd.f32 %v460, %v490
      %492 = vmatmul.f32.gmra.mxu0 %v411
      %v493 = vpop.f32.mrf.mxu0
      %v494 = vadd.f32 %v460, %v493
      %495 = vmatmul.f32.gmra.mxu0 %v414
      %v496 = vpop.f32.mrf.mxu0
      %v497 = vadd.f32 %v460, %v496
      %498 = vmatmul.f32.gmra.mxu0 %v417
      %v499 = vpop.f32.mrf.mxu0
      %v500 = vadd.f32 %v460, %v499
      %501 = vmatmul.f32.gmra.mxu0 %v420
      %v502 = vpop.f32.mrf.mxu0
      %v503 = vadd.f32 %v460, %v502
      %504 = vmatmul.f32.gmra.mxu0 %v423
      %v505 = vpop.f32.mrf.mxu0
      %v506 = vadd.f32 %v460, %v505
      %507 = vmatmul.f32.gmra.mxu0 %v426
      %v508 = vpop.f32.mrf.mxu0
      %v509 = vadd.f32 %v460, %v508
      %510 = vmatmul.f32.gmra.mxu0 %v429
      %v511 = vpop.f32.mrf.mxu0
      %v512 = vadd.f32 %v460, %v511
      %513 = vmatmul.f32.gmra.mxu0 %v432
      %v514 = vpop.f32.mrf.mxu0
      %v515 = vadd.f32 %v460, %v514
      %516 = vmatmul.f32.gmra.mxu0 %v435
      %v517 = vpop.f32.mrf.mxu0
      %v518 = vadd.f32 %v460, %v517
      %519 = vmatmul.f32.gmra.mxu0 %v438
      %v520 = vpop.f32.mrf.mxu0
      %v521 = vadd.f32 %v460, %v520
      %522 = vmatmul.f32.gmra.mxu0 %v441
      %v523 = vpop.f32.mrf.mxu0
      %v524 = vadd.f32 %v460, %v523
      %525 = vdwg.mxu0
      %v526 = vmax.f32 %v479, 0.0
      %v527 = vmax.f32 %v482, 0.0
      %v528 = vmax.f32 %v485, 0.0
      %v529 = vmax.f32 %v488, 0.0
      %v530 = vmax.f32 %v491, 0.0
      %v531 = vmax.f32 %v494, 0.0
      %v532 = vmax.f32 %v497, 0.0
      %v533 = vmax.f32 %v500, 0.0
      %v534 = vmax.f32 %v503, 0.0
      %v535 = vmax.f32 %v506, 0.0
      %v536 = vmax.f32 %v509, 0.0
      %v537 = vmax.f32 %v512, 0.0
      %v538 = vmax.f32 %v515, 0.0
      %v539 = vmax.f32 %v518, 0.0
      %v540 = vmax.f32 %v521, 0.0
      %v541 = vmax.f32 %v524, 0.0
      %v542 = vld [vmem:[%s289] sm:$0xff]
      %v543 = vld [vmem:[%s289 + $0x8] sm:$0xff]
      %v544 = vld [vmem:[%s289 + $0x10] sm:$0xff]
      %v545 = vld [vmem:[%s289 + $0x18] sm:$0xff]
      %v546 = vld [vmem:[%s289 + $0x20] sm:$0xff]
      %v547 = vld [vmem:[%s289 + $0x28] sm:$0xff]
      %v548 = vld [vmem:[%s289 + $0x30] sm:$0xff]
      %v549 = vld [vmem:[%s289 + $0x38] sm:$0xff]
      %v550 = vld [vmem:[%s289 + $0x40] sm:$0xff]
      %v551 = vld [vmem:[%s289 + $0x48] sm:$0xff]
      %v552 = vld [vmem:[%s289 + $0x50] sm:$0xff]
      %v553 = vld [vmem:[%s289 + $0x58] sm:$0xff]
      %v554 = vld [vmem:[%s289 + $0x60] sm:$0xff]
      %v555 = vld [vmem:[%s289 + $0x68] sm:$0xff]
      %v556 = vld [vmem:[%s289 + $0x70] sm:$0xff]
      %v557 = vld [vmem:[%s289 + $0x78] sm:$0xff]
      %v558 = vld [vmem:[%s293 + $0x1] sm:$0x1]
      %v559 = vperm.slane %v558, 0
      %560 = vmatpush.msra.mxu0 %v557
      %561 = vmatpush.msra.mxu0 %v556
      %562 = vmatpush.msra.mxu0 %v555
      %563 = vmatpush.msra.mxu0 %v554
      %564 = vmatpush.msra.mxu0 %v553
      %565 = vmatpush.msra.mxu0 %v552
      %566 = vmatpush.msra.mxu0 %v551
      %567 = vmatpush.msra.mxu0 %v550
      %568 = vmatpush.msra.mxu0 %v549
      %569 = vmatpush.msra.mxu0 %v548
      %570 = vmatpush.msra.mxu0 %v547
      %571 = vmatpush.msra.mxu0 %v546
      %572 = vmatpush.msra.mxu0 %v545
      %573 = vmatpush.msra.mxu0 %v544
      %574 = vmatpush.msra.mxu0 %v543
      %575 = vmatpush.msra.mxu0 %v542
      %576 = vmatmul.f32.gmra.mxu0 %v526
      %v577 = vpop.f32.mrf.mxu0
      %v578 = vadd.f32 %v559, %v577
      %579 = vmatmul.f32.gmra.mxu0 %v527
      %v580 = vpop.f32.mrf.mxu0
      %v581 = vadd.f32 %v559, %v580
      %582 = vmatmul.f32.gmra.mxu0 %v528
      %v583 = vpop.f32.mrf.mxu0
      %v584 = vadd.f32 %v559, %v583
      %585 = vmatmul.f32.gmra.mxu0 %v529
      %v586 = vpop.f32.mrf.mxu0
      %v587 = vadd.f32 %v559, %v586
      %588 = vmatmul.f32.gmra.mxu0 %v530
      %v589 = vpop.f32.mrf.mxu0
      %v590 = vadd.f32 %v559, %v589
      %591 = vmatmul.f32.gmra.mxu0 %v531
      %v592 = vpop.f32.mrf.mxu0
      %v593 = vadd.f32 %v559, %v592
      %594 = vmatmul.f32.gmra.mxu0 %v532
      %v595 = vpop.f32.mrf.mxu0
      %v596 = vadd.f32 %v559, %v595
      %597 = vmatmul.f32.gmra.mxu0 %v533
      %v598 = vpop.f32.mrf.mxu0
      %v599 = vadd.f32 %v559, %v598
      %600 = vmatmul.f32.gmra.mxu0 %v534
      %v601 = vpop.f32.mrf.mxu0
      %v602 = vadd.f32 %v559, %v601
      %603 = vmatmul.f32.gmra.mxu0 %v535
      %v604 = vpop.f32.mrf.mxu0
      %v605 = vadd.f32 %v559, %v604
      %606 = vmatmul.f32.gmra.mxu0 %v536
      %v607 = vpop.f32.mrf.mxu0
      %v608 = vadd.f32 %v559, %v607
      %609 = vmatmul.f32.gmra.mxu0 %v537
      %v610 = vpop.f32.mrf.mxu0
      %v611 = vadd.f32 %v559, %v610
      %612 = vmatmul.f32.gmra.mxu0 %v538
      %v613 = vpop.f32.mrf.mxu0
      %v614 = vadd.f32 %v559, %v613
      %615 = vmatmul.f32.gmra.mxu0 %v539
      %v616 = vpop.f32.mrf.mxu0
      %v617 = vadd.f32 %v559, %v616
      %618 = vmatmul.f32.gmra.mxu0 %v540
      %v619 = vpop.f32.mrf.mxu0
      %v620 = vadd.f32 %v559, %v619
      %621 = vmatmul.f32.gmra.mxu0 %v541
      %v622 = vpop.f32.mrf.mxu0
      %v623 = vadd.f32 %v559, %v622
      %624 = vdwg.mxu0
      %p625 = scmp.ne.s32.totalorder %s17, 1
      // Predicated region
      $region49: #{gnn_node_representation.1} parent=43 // pred_check
        %p626 = pneg %p625
      $region50: #{gnn_node_representation.1} parent=43 // pred_check_branch
        %628 = sbr.rel (%p626) target = $region52
      $region51: #{gnn_node_representation.1} parent=43 // pred_region
        %v629 = vmax.f32 %v578, 0.0
        %v630 = vmax.f32 %v581, 0.0
        %v631 = vmax.f32 %v584, 0.0
        %v632 = vmax.f32 %v587, 0.0
        %v633 = vmax.f32 %v590, 0.0
        %v634 = vmax.f32 %v593, 0.0
        %v635 = vmax.f32 %v596, 0.0
        %v636 = vmax.f32 %v599, 0.0
        %v637 = vmax.f32 %v602, 0.0
        %v638 = vmax.f32 %v605, 0.0
        %v639 = vmax.f32 %v608, 0.0
        %v640 = vmax.f32 %v611, 0.0
        %v641 = vmax.f32 %v614, 0.0
        %v642 = vmax.f32 %v617, 0.0
        %v643 = vmax.f32 %v620, 0.0
        %v644 = vmax.f32 %v623, 0.0
        %645 = vst [vmem:[%s6] sm:$0xff] %v629
        %646 = vst [vmem:[%s6 + $0x8] sm:$0xff] %v630
        %647 = vst [vmem:[%s6 + $0x10] sm:$0xff] %v631
        %648 = vst [vmem:[%s6 + $0x18] sm:$0xff] %v632
        %649 = vst [vmem:[%s6 + $0x20] sm:$0xff] %v633
        %650 = vst [vmem:[%s6 + $0x28] sm:$0xff] %v634
        %651 = vst [vmem:[%s6 + $0x30] sm:$0xff] %v635
        %652 = vst [vmem:[%s6 + $0x38] sm:$0xff] %v636
        %653 = vst [vmem:[%s6 + $0x40] sm:$0xff] %v637
        %654 = vst [vmem:[%s6 + $0x48] sm:$0xff] %v638
        %655 = vst [vmem:[%s6 + $0x50] sm:$0xff] %v639
        %656 = vst [vmem:[%s6 + $0x58] sm:$0xff] %v640
        %657 = vst [vmem:[%s6 + $0x60] sm:$0xff] %v641
        %658 = vst [vmem:[%s6 + $0x68] sm:$0xff] %v642
        %659 = vst [vmem:[%s6 + $0x70] sm:$0xff] %v643
        %660 = vst [vmem:[%s6 + $0x78] sm:$0xff] %v644
      $region52: #{gnn_node_representation.1} parent=43 // pred_fallthru
        _
      %p661 = scmp.eq.s32.totalorder %s17, 1
      // Predicated region
      $region53: #{gnn_node_representation.1} parent=43 // pred_check
        %p662 = pneg %p661
      $region54: #{gnn_node_representation.1} parent=43 // pred_check_branch
        %664 = sbr.rel (%p662) target = $region56
      $region55: #{gnn_node_representation.1} parent=43 // pred_region
        %665 = vst [vmem:[%s6] sm:$0xff] %v578
        %666 = vst [vmem:[%s6 + $0x8] sm:$0xff] %v581
        %667 = vst [vmem:[%s6 + $0x10] sm:$0xff] %v584
        %668 = vst [vmem:[%s6 + $0x18] sm:$0xff] %v587
        %669 = vst [vmem:[%s6 + $0x20] sm:$0xff] %v590
        %670 = vst [vmem:[%s6 + $0x28] sm:$0xff] %v593
        %671 = vst [vmem:[%s6 + $0x30] sm:$0xff] %v596
        %672 = vst [vmem:[%s6 + $0x38] sm:$0xff] %v599
        %673 = vst [vmem:[%s6 + $0x40] sm:$0xff] %v602
        %674 = vst [vmem:[%s6 + $0x48] sm:$0xff] %v605
        %675 = vst [vmem:[%s6 + $0x50] sm:$0xff] %v608
        %676 = vst [vmem:[%s6 + $0x58] sm:$0xff] %v611
        %677 = vst [vmem:[%s6 + $0x60] sm:$0xff] %v614
        %678 = vst [vmem:[%s6 + $0x68] sm:$0xff] %v617
        %679 = vst [vmem:[%s6 + $0x70] sm:$0xff] %v620
        %680 = vst [vmem:[%s6 + $0x78] sm:$0xff] %v623
      $region56: #{gnn_node_representation.1} parent=43 // pred_fallthru
        _
      // Predicated region
      $region57: #{gnn_node_representation.1} parent=43 // pred_check
        %p681 = pneg %p176
      $region58: #{gnn_node_representation.1} parent=43 // pred_check_branch
        %683 = sbr.rel (%p681) target = $region60
      $region59: #{gnn_node_representation.1} parent=43 // pred_region
        _
      $region60: #{gnn_node_representation.1} parent=43 // pred_fallthru
        _
      // Predicated region
      $region61: #{gnn_node_representation.1} parent=43 // pred_check
        %p684 = pneg %p176
      $region62: #{gnn_node_representation.1} parent=43 // pred_check_branch
        %686 = sbr.rel (%p684) target = $region64
      $region63: #{gnn_node_representation.1} parent=43 // pred_region
        _
      $region64: #{gnn_node_representation.1} parent=43 // pred_fallthru
        _
    $region44: #{gnn_node_representation.1} parent=5 // pred_fallthru
      _
    %p687 = scmp.le.s32.totalorder 2, %s12
    // Predicated region
    $region65: #{gnn_node_representation.1} parent=5 // pred_check
      %p688 = pneg %p687
    $region66: #{gnn_node_representation.1} parent=5 // pred_check_branch
      %690 = sbr.rel (%p688) target = $region68
    $region67: #{gnn_node_representation.1} parent=5 // pred_region
      %s691 = ssub.s32 %s12, 2
    $region68: #{gnn_node_representation.1} parent=5 // pred_fallthru
      _
  $region6: #{gnn_node_representation.1} parent=0 // loop_footer
    %s16 = sadd.s32 1, %s12
  $region7: #{gnn_node_representation.1} parent=0 // loop_footer_branch
    %11 = sbr.rel target = $region3
  $region8: #{gnn_node_representation.1} parent=0 // loop_exit
    _

</llo_original>
